<compile_context>
chip_gen: v7x
topology: tpu7x:2x2x1
jax: 0.10.0
libtpu: 0.0.40
codegen_flags: <defaults>
</compile_context>

<pallas_src>
import math
import functools

import jax
import jax.numpy as jnp
from jax.experimental import pallas as pl
from jax.experimental.pallas import tpu as pltpu


def _layernorm(h, gamma, beta, eps=1e-5):
    mu = jnp.mean(h, axis=-1, keepdims=True)
    var = jnp.mean((h - mu) ** 2, axis=-1, keepdims=True)
    return (h - mu) * jax.lax.rsqrt(var + eps) * gamma + beta


def transformer_block_kernel(
    x_ref,                       # (T, D)   current batch element (f32)
    ln1_g_ref, ln1_b_ref,        # (1, D)   f32
    wq_ref, wk_ref, wv_ref,      # (D, D)   bf16, Wq pre-scaled by 1/sqrt(head_size)
    wproj_ref, bproj_ref,        # (D, D) bf16, (1, D) f32
    ln2_g_ref, ln2_b_ref,        # (1, D)   f32
    w1_ref, b1_ref,              # (D, 4D) bf16, (1, 4D) f32
    w2_ref, b2_ref,              # (4D, D) bf16, (1, D) f32
    o_ref,                       # (T, D)   output
    cat_ref,                     # (T, D)   f32 VMEM scratch: concatenated head outputs
    *, num_heads, head_size, ffn_chunk,
):
    x = x_ref[...].astype(jnp.float32)
    T, D = x.shape

    # ----- LayerNorm 1 (f32) -----
    xn = _layernorm(x, ln1_g_ref[...], ln1_b_ref[...])
    xn_b = xn.astype(jnp.bfloat16)

    # ----- fused full-width Q/K/V projections (bf16 x bf16 -> f32 accumulate) -----
    q = jnp.dot(xn_b, wq_ref[...], preferred_element_type=jnp.float32)   # (T, D), scale folded in
    k = jnp.dot(xn_b, wk_ref[...], preferred_element_type=jnp.float32)
    v = jnp.dot(xn_b, wv_ref[...], preferred_element_type=jnp.float32)

    # causal mask, shared by all heads
    row = jax.lax.broadcasted_iota(jnp.int32, (T, T), 0)
    col = jax.lax.broadcasted_iota(jnp.int32, (T, T), 1)
    causal = row >= col
    neg_big = jnp.float32(-1e30)

    # ----- per-head attention; contexts written directly into their target columns -----
    # (static loop over a small head count; only one head's (T,T) scores are needed at a time)
    for h in range(num_heads):
        lo, hi = h * head_size, (h + 1) * head_size
        qh = q[:, lo:hi].astype(jnp.bfloat16)
        kh = k[:, lo:hi].astype(jnp.bfloat16)
        vh = v[:, lo:hi].astype(jnp.bfloat16)

        s = jnp.einsum("td,sd->ts", qh, kh, preferred_element_type=jnp.float32)
        s = jnp.where(causal, s, neg_big)
        s = s - jnp.max(s, axis=-1, keepdims=True)
        p = jnp.exp(s)
        p = p * pl.reciprocal(jnp.sum(p, axis=-1, keepdims=True), approx=True)

        cat_ref[:, lo:hi] = jnp.dot(p.astype(jnp.bfloat16), vh,
                                    preferred_element_type=jnp.float32)

    # ----- output projection (single full-width matmul) + residual 1 -----
    attn = jnp.dot(cat_ref[...].astype(jnp.bfloat16), wproj_ref[...],
                   preferred_element_type=jnp.float32) + bproj_ref[...]
    x = x + attn

    # ----- LayerNorm 2 + chunked FFN + residual 2 -----
    xn2 = _layernorm(x, ln2_g_ref[...], ln2_b_ref[...])
    xn2_b = xn2.astype(jnp.bfloat16)

    hidden = w1_ref.shape[1]
    n_chunks = hidden // ffn_chunk

    def ffn_step(c, acc):
        start = pl.multiple_of(c * ffn_chunk, ffn_chunk)
        w1c = w1_ref[:, pl.ds(start, ffn_chunk)]
        b1c = b1_ref[:, pl.ds(start, ffn_chunk)]
        hid = jnp.dot(xn2_b, w1c, preferred_element_type=jnp.float32) + b1c
        hid = jnp.maximum(hid, 0.0)                                   # ReLU
        w2c = w2_ref[pl.ds(start, ffn_chunk), :]
        return acc + jnp.dot(hid.astype(jnp.bfloat16), w2c,
                             preferred_element_type=jnp.float32)

    ff = jax.lax.fori_loop(0, n_chunks, ffn_step, jnp.zeros((T, D), jnp.float32))
    ff = ff + b2_ref[...]

    o_ref[...] = (x + ff).astype(o_ref.dtype)


def transformer_block(x, params, *, num_heads, head_size, ffn_chunk):
    """x: (B, T, D) float32; params already prepared (bf16 weights, scaled Wq)."""
    B, T, D = x.shape
    assert num_heads * head_size == D
    H4 = params["w1"].shape[1]
    assert H4 % ffn_chunk == 0

    full = lambda shape: pl.BlockSpec(shape, lambda b: (0,) * len(shape))

    kernel = functools.partial(
        transformer_block_kernel,
        num_heads=num_heads, head_size=head_size, ffn_chunk=ffn_chunk,
    )

    return pl.pallas_call(
        kernel,
        out_shape=jax.ShapeDtypeStruct((B, T, D), x.dtype),
        grid_spec=pltpu.PrefetchScalarGridSpec(
            num_scalar_prefetch=0,
            grid=(B,),
            in_specs=[
                pl.BlockSpec((None, T, D), lambda b: (b, 0, 0)),     # x
                full((1, D)), full((1, D)),                          # ln1 gamma/beta
                full((D, D)), full((D, D)), full((D, D)),            # Wq, Wk, Wv (fused heads)
                full((D, D)), full((1, D)),                          # proj W, b
                full((1, D)), full((1, D)),                          # ln2 gamma/beta
                full((D, H4)), full((1, H4)),                        # ffn W1, b1
                full((H4, D)), full((1, D)),                         # ffn W2, b2
            ],
            out_specs=pl.BlockSpec((None, T, D), lambda b: (b, 0, 0)),
            scratch_shapes=[pltpu.VMEM((T, D), jnp.float32)],        # concatenated head outputs
        ),
        compiler_params=pltpu.CompilerParams(
            dimension_semantics=("parallel",),
            vmem_limit_bytes=48 * 1024 * 1024,
        ),
    )(
        x,
        params["ln1_g"], params["ln1_b"],
        params["wq"], params["wk"], params["wv"],
        params["wproj"], params["bproj"],
        params["ln2_g"], params["ln2_b"],
        params["w1"], params["b1"],
        params["w2"], params["b2"],
    )


def init_params(key, d_model):
    """Deterministic synthetic parameters (x @ W convention; heads fused along columns)."""
    ks = jax.random.split(key, 6)
    scale = 0.02
    return {
        "ln1_g": jnp.ones((1, d_model), jnp.float32),
        "ln1_b": jnp.zeros((1, d_model), jnp.float32),
        "wq": scale * jax.random.normal(ks[0], (d_model, d_model), jnp.float32),
        "wk": scale * jax.random.normal(ks[1], (d_model, d_model), jnp.float32),
        "wv": scale * jax.random.normal(ks[2], (d_model, d_model), jnp.float32),
        "wproj": scale * jax.random.normal(ks[3], (d_model, d_model), jnp.float32),
        "bproj": jnp.zeros((1, d_model), jnp.float32),
        "ln2_g": jnp.ones((1, d_model), jnp.float32),
        "ln2_b": jnp.zeros((1, d_model), jnp.float32),
        "w1": scale * jax.random.normal(ks[4], (d_model, 4 * d_model), jnp.float32),
        "b1": jnp.zeros((1, 4 * d_model), jnp.float32),
        "w2": scale * jax.random.normal(ks[5], (4 * d_model, d_model), jnp.float32),
        "b2": jnp.zeros((1, d_model), jnp.float32),
    }


def prepare_params(p, head_size):
    """Host-side prep: fold 1/sqrt(head_size) into Wq, cast matmul weights to bf16."""
    bf = lambda w: w.astype(jnp.bfloat16)
    return {
        "ln1_g": p["ln1_g"], "ln1_b": p["ln1_b"],
        "wq": bf(p["wq"] * (1.0 / math.sqrt(head_size))),
        "wk": bf(p["wk"]),
        "wv": bf(p["wv"]),
        "wproj": bf(p["wproj"]), "bproj": p["bproj"],
        "ln2_g": p["ln2_g"], "ln2_b": p["ln2_b"],
        "w1": bf(p["w1"]), "b1": p["b1"],
        "w2": bf(p["w2"]), "b2": p["b2"],
    }


def _ln_ref(h, g, b, eps=1e-5):
    mu = jnp.mean(h, -1, keepdims=True)
    var = jnp.mean((h - mu) ** 2, -1, keepdims=True)
    return (h - mu) / jnp.sqrt(var + eps) * g + b


def reference_block_bf16(x, pp, *, num_heads, head_size):
    """Pure-JAX reference mirroring the kernel's precision policy (bf16 matmul operands,
    f32 accumulation, exact softmax division). Dropout = identity."""
    def mm(a, w):
        return jnp.dot(a.astype(jnp.bfloat16), w.astype(jnp.bfloat16),
                       preferred_element_type=jnp.float32)

    B, T, D = x.shape
    hs = head_size
    xn = _ln_ref(x, pp["ln1_g"], pp["ln1_b"])
    q = mm(xn, pp["wq"]); k = mm(xn, pp["wk"]); v = mm(xn, pp["wv"])
    mask = jnp.tril(jnp.ones((T, T), bool))
    outs = []
    for h in range(num_heads):
        qh = q[..., h * hs:(h + 1) * hs].astype(jnp.bfloat16)
        kh = k[..., h * hs:(h + 1) * hs].astype(jnp.bfloat16)
        vh = v[..., h * hs:(h + 1) * hs].astype(jnp.bfloat16)
        s = jnp.einsum("btd,bsd->bts", qh, kh, preferred_element_type=jnp.float32)
        s = jnp.where(mask, s, -1e30)
        s = s - jnp.max(s, -1, keepdims=True)
        p = jnp.exp(s)
        p = p / jnp.sum(p, -1, keepdims=True)
        outs.append(jnp.einsum("bts,bsd->btd", p.astype(jnp.bfloat16), vh,
                               preferred_element_type=jnp.float32))
    cat = jnp.concatenate(outs, -1)
    x = x + mm(cat, pp["wproj"]) + pp["bproj"]
    xn2 = _ln_ref(x, pp["ln2_g"], pp["ln2_b"])
    hid = jnp.maximum(mm(xn2, pp["w1"]) + pp["b1"], 0.0)
    return x + mm(hid, pp["w2"]) + pp["b2"]


def reference_block_f32(x, p, *, num_heads, head_size):
    """Full-f32 reference mirroring the PyTorch forward (dropout = identity)."""
    B, T, D = x.shape
    hs = head_size
    xn = _ln_ref(x, p["ln1_g"], p["ln1_b"])
    q = xn @ p["wq"]; k = xn @ p["wk"]; v = xn @ p["wv"]
    mask = jnp.tril(jnp.ones((T, T), bool))
    outs = []
    for h in range(num_heads):
        qh = q[..., h * hs:(h + 1) * hs]
        kh = k[..., h * hs:(h + 1) * hs]
        vh = v[..., h * hs:(h + 1) * hs]
        s = jnp.einsum("btd,bsd->bts", qh, kh) / math.sqrt(hs)
        s = jnp.where(mask, s, -jnp.inf)
        w = jax.nn.softmax(s, axis=-1)
        outs.append(jnp.einsum("bts,bsd->btd", w, vh))
    cat = jnp.concatenate(outs, -1)
    x = x + cat @ p["wproj"] + p["bproj"]
    xn2 = _ln_ref(x, p["ln2_g"], p["ln2_b"])
    hid = jnp.maximum(xn2 @ p["w1"] + p["b1"], 0.0)
    return x + hid @ p["w2"] + p["b2"]


if __name__ == "__main__":
    d_model = 32
    num_heads = 4
    head_size = d_model // num_heads     # 8
    context_length = 8
    B, T = 2, context_length

    key = jax.random.PRNGKey(0)
    k_x, k_p = jax.random.split(key)
    x = jax.random.normal(k_x, (B, T, d_model), jnp.float32)

    raw_params = init_params(k_p, d_model)
    prepared = prepare_params(raw_params, head_size)

    ffn_chunk = min(512, 4 * d_model)    # chunk the 4*D hidden dim; full width at demo size
    assert (4 * d_model) % ffn_chunk == 0

    out = transformer_block(x, prepared, num_heads=num_heads,
                            head_size=head_size, ffn_chunk=ffn_chunk)
    out = jax.block_until_ready(out)
    assert out.shape == (B, T, d_model)

    # Tight check vs a reference with the kernel's precision policy.
    ref_bf16 = reference_block_bf16(x, prepared, num_heads=num_heads, head_size=head_size)
    assert jnp.allclose(out, ref_bf16, atol=2e-3, rtol=2e-3), "mismatch vs bf16-precision reference"

    # Looser check vs the full-f32 PyTorch-faithful math.
    ref_f32 = reference_block_f32(x, raw_params, num_heads=num_heads, head_size=head_size)
    assert jnp.allclose(out, ref_f32, atol=3e-2, rtol=3e-2), "mismatch vs f32 reference"

    print("KERNEL_OK")
</pallas_src>

<mosaic_0001>
module attributes {stable_mosaic.version = 11 : i64} {
  func.func @transformer_block_kernel(%arg0: i32, %arg1: memref<1x8x32xf32, #tpu.memory_space<vmem>>, %arg2: memref<1x32xf32, #tpu.memory_space<vmem>>, %arg3: memref<1x32xf32, #tpu.memory_space<vmem>>, %arg4: memref<32x32xbf16, #tpu.memory_space<vmem>>, %arg5: memref<32x32xbf16, #tpu.memory_space<vmem>>, %arg6: memref<32x32xbf16, #tpu.memory_space<vmem>>, %arg7: memref<32x32xbf16, #tpu.memory_space<vmem>>, %arg8: memref<1x32xf32, #tpu.memory_space<vmem>>, %arg9: memref<1x32xf32, #tpu.memory_space<vmem>>, %arg10: memref<1x32xf32, #tpu.memory_space<vmem>>, %arg11: memref<32x128xbf16, #tpu.memory_space<vmem>>, %arg12: memref<1x128xf32, #tpu.memory_space<vmem>>, %arg13: memref<128x32xbf16, #tpu.memory_space<vmem>>, %arg14: memref<1x32xf32, #tpu.memory_space<vmem>>, %arg15: memref<1x8x32xf32, #tpu.memory_space<vmem>>, %arg16: memref<8x32xf32, #tpu.memory_space<vmem>>) attributes {dimension_semantics = [#tpu.dimension_semantics<parallel>], iteration_bounds = array<i64: 2>, scalar_prefetch = 0 : i64, scratch_operands = 1 : i64, tpu.core_type = #tpu.core_type<tc>, window_params = [{transform_indices = @transform_0, window_bounds = array<i64: 1, 8, 32>}, {pipeline_mode = #tpu.pipeline_mode<synchronous>, transform_indices = @transform_1, window_bounds = array<i64: 1, 32>}, {pipeline_mode = #tpu.pipeline_mode<synchronous>, transform_indices = @transform_2, window_bounds = array<i64: 1, 32>}, {pipeline_mode = #tpu.pipeline_mode<synchronous>, transform_indices = @transform_3, window_bounds = array<i64: 32, 32>}, {pipeline_mode = #tpu.pipeline_mode<synchronous>, transform_indices = @transform_4, window_bounds = array<i64: 32, 32>}, {pipeline_mode = #tpu.pipeline_mode<synchronous>, transform_indices = @transform_5, window_bounds = array<i64: 32, 32>}, {pipeline_mode = #tpu.pipeline_mode<synchronous>, transform_indices = @transform_6, window_bounds = array<i64: 32, 32>}, {pipeline_mode = #tpu.pipeline_mode<synchronous>, transform_indices = @transform_7, window_bounds = array<i64: 1, 32>}, {pipeline_mode = #tpu.pipeline_mode<synchronous>, transform_indices = @transform_8, window_bounds = array<i64: 1, 32>}, {pipeline_mode = #tpu.pipeline_mode<synchronous>, transform_indices = @transform_9, window_bounds = array<i64: 1, 32>}, {pipeline_mode = #tpu.pipeline_mode<synchronous>, transform_indices = @transform_10, window_bounds = array<i64: 32, 128>}, {pipeline_mode = #tpu.pipeline_mode<synchronous>, transform_indices = @transform_11, window_bounds = array<i64: 1, 128>}, {pipeline_mode = #tpu.pipeline_mode<synchronous>, transform_indices = @transform_12, window_bounds = array<i64: 128, 32>}, {pipeline_mode = #tpu.pipeline_mode<synchronous>, transform_indices = @transform_13, window_bounds = array<i64: 1, 32>}, {transform_indices = @transform_14, window_bounds = array<i64: 1, 8, 32>}]} {
    %c0 = arith.constant 0 : index
    %c0_0 = arith.constant 0 : index
    %c0_1 = arith.constant 0 : index
    %0 = vector.load %arg1[%c0, %c0_0, %c0_1] : memref<1x8x32xf32, #tpu.memory_space<vmem>>, vector<1x8x32xf32>
    %1 = vector.shape_cast %0 : vector<1x8x32xf32> to vector<8x32xf32>
    %c0_2 = arith.constant 0 : index
    %c0_3 = arith.constant 0 : index
    %2 = vector.load %arg2[%c0_2, %c0_3] : memref<1x32xf32, #tpu.memory_space<vmem>>, vector<1x32xf32>
    %c0_4 = arith.constant 0 : index
    %c0_5 = arith.constant 0 : index
    %3 = vector.load %arg3[%c0_4, %c0_5] : memref<1x32xf32, #tpu.memory_space<vmem>>, vector<1x32xf32>
    %cst = arith.constant dense<0.000000e+00> : vector<8xf32>
    %4 = vector.multi_reduction <add>, %1, %cst [1] : vector<8x32xf32> to vector<8xf32>
    %5 = vector.shape_cast %4 : vector<8xf32> to vector<8x1xf32>
    %cst_6 = arith.constant 3.200000e+01 : f32
    %6 = vector.broadcast %cst_6 : f32 to vector<8x1xf32>
    %7 = arith.divf %5, %6 : vector<8x1xf32>
    %8 = vector.broadcast %7 : vector<8x1xf32> to vector<8x32xf32>
    %9 = arith.subf %1, %8 : vector<8x32xf32>
    %10 = arith.mulf %9, %9 : vector<8x32xf32>
    %cst_7 = arith.constant dense<0.000000e+00> : vector<8xf32>
    %11 = vector.multi_reduction <add>, %10, %cst_7 [1] : vector<8x32xf32> to vector<8xf32>
    %12 = vector.shape_cast %11 : vector<8xf32> to vector<8x1xf32>
    %cst_8 = arith.constant 3.200000e+01 : f32
    %13 = vector.broadcast %cst_8 : f32 to vector<8x1xf32>
    %14 = arith.divf %12, %13 : vector<8x1xf32>
    %15 = vector.broadcast %7 : vector<8x1xf32> to vector<8x32xf32>
    %16 = arith.subf %1, %15 : vector<8x32xf32>
    %cst_9 = arith.constant 9.99999974E-6 : f32
    %17 = vector.broadcast %cst_9 : f32 to vector<8x1xf32>
    %18 = arith.addf %14, %17 : vector<8x1xf32>
    %19 = math.rsqrt %18 : vector<8x1xf32>
    %20 = vector.broadcast %19 : vector<8x1xf32> to vector<8x32xf32>
    %21 = arith.mulf %16, %20 : vector<8x32xf32>
    %22 = vector.broadcast %2 : vector<1x32xf32> to vector<8x32xf32>
    %23 = arith.mulf %21, %22 : vector<8x32xf32>
    %24 = vector.broadcast %3 : vector<1x32xf32> to vector<8x32xf32>
    %25 = arith.addf %23, %24 : vector<8x32xf32>
    %26 = arith.truncf %25 : vector<8x32xf32> to vector<8x32xbf16>
    %c0_10 = arith.constant 0 : index
    %c0_11 = arith.constant 0 : index
    %27 = vector.load %arg4[%c0_10, %c0_11] : memref<32x32xbf16, #tpu.memory_space<vmem>>, vector<32x32xbf16>
    %cst_12 = arith.constant dense<0.000000e+00> : vector<8x32xf32>
    %28 = tpu.matmul %26, %27, %cst_12 {dimension_numbers = #tpu.dot_dimension_numbers<[1], [0], [0], [1], [0, 0, 1, 1], [], []>} : vector<8x32xbf16>, vector<32x32xbf16>, vector<8x32xf32> -> vector<8x32xf32>
    %c0_13 = arith.constant 0 : index
    %c0_14 = arith.constant 0 : index
    %29 = vector.load %arg5[%c0_13, %c0_14] : memref<32x32xbf16, #tpu.memory_space<vmem>>, vector<32x32xbf16>
    %cst_15 = arith.constant dense<0.000000e+00> : vector<8x32xf32>
    %30 = tpu.matmul %26, %29, %cst_15 {dimension_numbers = #tpu.dot_dimension_numbers<[1], [0], [0], [1], [0, 0, 1, 1], [], []>} : vector<8x32xbf16>, vector<32x32xbf16>, vector<8x32xf32> -> vector<8x32xf32>
    %c0_16 = arith.constant 0 : index
    %c0_17 = arith.constant 0 : index
    %31 = vector.load %arg6[%c0_16, %c0_17] : memref<32x32xbf16, #tpu.memory_space<vmem>>, vector<32x32xbf16>
    %cst_18 = arith.constant dense<0.000000e+00> : vector<8x32xf32>
    %32 = tpu.matmul %26, %31, %cst_18 {dimension_numbers = #tpu.dot_dimension_numbers<[1], [0], [0], [1], [0, 0, 1, 1], [], []>} : vector<8x32xbf16>, vector<32x32xbf16>, vector<8x32xf32> -> vector<8x32xf32>
    %33 = tpu.iota {dimensions = array<i32: 0>} : vector<8x8xi32>
    %34 = tpu.iota {dimensions = array<i32: 1>} : vector<8x8xi32>
    %35 = arith.cmpi sge, %33, %34 : vector<8x8xi32>
    %36 = vector.extract_strided_slice %28 {offsets = [0, 0], sizes = [8, 8], strides = [1, 1]} : vector<8x32xf32> to vector<8x8xf32>
    %37 = arith.truncf %36 : vector<8x8xf32> to vector<8x8xbf16>
    %38 = vector.extract_strided_slice %30 {offsets = [0, 0], sizes = [8, 8], strides = [1, 1]} : vector<8x32xf32> to vector<8x8xf32>
    %39 = arith.truncf %38 : vector<8x8xf32> to vector<8x8xbf16>
    %40 = vector.extract_strided_slice %32 {offsets = [0, 0], sizes = [8, 8], strides = [1, 1]} : vector<8x32xf32> to vector<8x8xf32>
    %41 = arith.truncf %40 : vector<8x8xf32> to vector<8x8xbf16>
    "tpu.trace_start"() <{level = 10 : i32, message = "td,sd->ts"}> : () -> ()
    %cst_19 = arith.constant dense<0.000000e+00> : vector<8x8xf32>
    %42 = tpu.matmul %37, %39, %cst_19 {dimension_numbers = #tpu.dot_dimension_numbers<[1], [1], [0], [0], [0, 0, 1, 0], [], []>} : vector<8x8xbf16>, vector<8x8xbf16>, vector<8x8xf32> -> vector<8x8xf32>
    %cst_20 = arith.constant -1.000000e+30 : f32
    "tpu.trace_stop"() : () -> ()
    %43 = vector.broadcast %cst_20 : f32 to vector<8x8xf32>
    %44 = arith.select %35, %42, %43 : vector<8x8xi1>, vector<8x8xf32>
    %cst_21 = arith.constant dense<0xFF800000> : vector<8xf32>
    %45 = vector.multi_reduction <maximumf>, %44, %cst_21 [1] : vector<8x8xf32> to vector<8xf32>
    %46 = vector.shape_cast %45 : vector<8xf32> to vector<8x1xf32>
    %47 = vector.broadcast %46 : vector<8x1xf32> to vector<8x8xf32>
    %48 = arith.subf %44, %47 : vector<8x8xf32>
    %49 = math.exp %48 : vector<8x8xf32>
    %cst_22 = arith.constant dense<0.000000e+00> : vector<8xf32>
    %50 = vector.multi_reduction <add>, %49, %cst_22 [1] : vector<8x8xf32> to vector<8xf32>
    %51 = vector.shape_cast %50 : vector<8xf32> to vector<8x1xf32>
    %52 = tpu.reciprocal %51 {approx = true} : vector<8x1xf32> -> vector<8x1xf32>
    %53 = vector.broadcast %52 : vector<8x1xf32> to vector<8x8xf32>
    %54 = arith.mulf %49, %53 : vector<8x8xf32>
    %55 = arith.truncf %54 : vector<8x8xf32> to vector<8x8xbf16>
    %cst_23 = arith.constant dense<0.000000e+00> : vector<8x8xf32>
    %56 = tpu.matmul %55, %41, %cst_23 {dimension_numbers = #tpu.dot_dimension_numbers<[1], [0], [0], [1], [0, 0, 1, 1], [], []>} : vector<8x8xbf16>, vector<8x8xbf16>, vector<8x8xf32> -> vector<8x8xf32>
    %c0_24 = arith.constant 0 : index
    %c0_25 = arith.constant 0 : index
    %57 = vector.load %arg16[%c0_24, %c0_25] : memref<8x32xf32, #tpu.memory_space<vmem>>, vector<8x8xf32>
    tpu.vector_store %arg16[%c0_24, %c0_25], %56 {strides = array<i32>} : memref<8x32xf32, #tpu.memory_space<vmem>>, vector<8x8xf32>,
    %58 = vector.extract_strided_slice %28 {offsets = [0, 8], sizes = [8, 8], strides = [1, 1]} : vector<8x32xf32> to vector<8x8xf32>
    %59 = arith.truncf %58 : vector<8x8xf32> to vector<8x8xbf16>
    %60 = vector.extract_strided_slice %30 {offsets = [0, 8], sizes = [8, 8], strides = [1, 1]} : vector<8x32xf32> to vector<8x8xf32>
    %61 = arith.truncf %60 : vector<8x8xf32> to vector<8x8xbf16>
    %62 = vector.extract_strided_slice %32 {offsets = [0, 8], sizes = [8, 8], strides = [1, 1]} : vector<8x32xf32> to vector<8x8xf32>
    %63 = arith.truncf %62 : vector<8x8xf32> to vector<8x8xbf16>
    "tpu.trace_start"() <{level = 10 : i32, message = "td,sd->ts"}> : () -> ()
    %cst_26 = arith.constant dense<0.000000e+00> : vector<8x8xf32>
    %64 = tpu.matmul %59, %61, %cst_26 {dimension_numbers = #tpu.dot_dimension_numbers<[1], [1], [0], [0], [0, 0, 1, 0], [], []>} : vector<8x8xbf16>, vector<8x8xbf16>, vector<8x8xf32> -> vector<8x8xf32>
    %cst_27 = arith.constant -1.000000e+30 : f32
    "tpu.trace_stop"() : () -> ()
    %65 = vector.broadcast %cst_27 : f32 to vector<8x8xf32>
    %66 = arith.select %35, %64, %65 : vector<8x8xi1>, vector<8x8xf32>
    %cst_28 = arith.constant dense<0xFF800000> : vector<8xf32>
    %67 = vector.multi_reduction <maximumf>, %66, %cst_28 [1] : vector<8x8xf32> to vector<8xf32>
    %68 = vector.shape_cast %67 : vector<8xf32> to vector<8x1xf32>
    %69 = vector.broadcast %68 : vector<8x1xf32> to vector<8x8xf32>
    %70 = arith.subf %66, %69 : vector<8x8xf32>
    %71 = math.exp %70 : vector<8x8xf32>
    %cst_29 = arith.constant dense<0.000000e+00> : vector<8xf32>
    %72 = vector.multi_reduction <add>, %71, %cst_29 [1] : vector<8x8xf32> to vector<8xf32>
    %73 = vector.shape_cast %72 : vector<8xf32> to vector<8x1xf32>
    %74 = tpu.reciprocal %73 {approx = true} : vector<8x1xf32> -> vector<8x1xf32>
    %75 = vector.broadcast %74 : vector<8x1xf32> to vector<8x8xf32>
    %76 = arith.mulf %71, %75 : vector<8x8xf32>
    %77 = arith.truncf %76 : vector<8x8xf32> to vector<8x8xbf16>
    %cst_30 = arith.constant dense<0.000000e+00> : vector<8x8xf32>
    %78 = tpu.matmul %77, %63, %cst_30 {dimension_numbers = #tpu.dot_dimension_numbers<[1], [0], [0], [1], [0, 0, 1, 1], [], []>} : vector<8x8xbf16>, vector<8x8xbf16>, vector<8x8xf32> -> vector<8x8xf32>
    %c0_31 = arith.constant 0 : index
    %c8 = arith.constant 8 : index
    %79 = vector.load %arg16[%c0_31, %c8] : memref<8x32xf32, #tpu.memory_space<vmem>>, vector<8x8xf32>
    tpu.vector_store %arg16[%c0_31, %c8], %78 {strides = array<i32>} : memref<8x32xf32, #tpu.memory_space<vmem>>, vector<8x8xf32>,
    %80 = vector.extract_strided_slice %28 {offsets = [0, 16], sizes = [8, 8], strides = [1, 1]} : vector<8x32xf32> to vector<8x8xf32>
    %81 = arith.truncf %80 : vector<8x8xf32> to vector<8x8xbf16>
    %82 = vector.extract_strided_slice %30 {offsets = [0, 16], sizes = [8, 8], strides = [1, 1]} : vector<8x32xf32> to vector<8x8xf32>
    %83 = arith.truncf %82 : vector<8x8xf32> to vector<8x8xbf16>
    %84 = vector.extract_strided_slice %32 {offsets = [0, 16], sizes = [8, 8], strides = [1, 1]} : vector<8x32xf32> to vector<8x8xf32>
    %85 = arith.truncf %84 : vector<8x8xf32> to vector<8x8xbf16>
    "tpu.trace_start"() <{level = 10 : i32, message = "td,sd->ts"}> : () -> ()
    %cst_32 = arith.constant dense<0.000000e+00> : vector<8x8xf32>
    %86 = tpu.matmul %81, %83, %cst_32 {dimension_numbers = #tpu.dot_dimension_numbers<[1], [1], [0], [0], [0, 0, 1, 0], [], []>} : vector<8x8xbf16>, vector<8x8xbf16>, vector<8x8xf32> -> vector<8x8xf32>
    %cst_33 = arith.constant -1.000000e+30 : f32
    "tpu.trace_stop"() : () -> ()
    %87 = vector.broadcast %cst_33 : f32 to vector<8x8xf32>
    %88 = arith.select %35, %86, %87 : vector<8x8xi1>, vector<8x8xf32>
    %cst_34 = arith.constant dense<0xFF800000> : vector<8xf32>
    %89 = vector.multi_reduction <maximumf>, %88, %cst_34 [1] : vector<8x8xf32> to vector<8xf32>
    %90 = vector.shape_cast %89 : vector<8xf32> to vector<8x1xf32>
    %91 = vector.broadcast %90 : vector<8x1xf32> to vector<8x8xf32>
    %92 = arith.subf %88, %91 : vector<8x8xf32>
    %93 = math.exp %92 : vector<8x8xf32>
    %cst_35 = arith.constant dense<0.000000e+00> : vector<8xf32>
    %94 = vector.multi_reduction <add>, %93, %cst_35 [1] : vector<8x8xf32> to vector<8xf32>
    %95 = vector.shape_cast %94 : vector<8xf32> to vector<8x1xf32>
    %96 = tpu.reciprocal %95 {approx = true} : vector<8x1xf32> -> vector<8x1xf32>
    %97 = vector.broadcast %96 : vector<8x1xf32> to vector<8x8xf32>
    %98 = arith.mulf %93, %97 : vector<8x8xf32>
    %99 = arith.truncf %98 : vector<8x8xf32> to vector<8x8xbf16>
    %cst_36 = arith.constant dense<0.000000e+00> : vector<8x8xf32>
    %100 = tpu.matmul %99, %85, %cst_36 {dimension_numbers = #tpu.dot_dimension_numbers<[1], [0], [0], [1], [0, 0, 1, 1], [], []>} : vector<8x8xbf16>, vector<8x8xbf16>, vector<8x8xf32> -> vector<8x8xf32>
    %c0_37 = arith.constant 0 : index
    %c16 = arith.constant 16 : index
    %101 = vector.load %arg16[%c0_37, %c16] : memref<8x32xf32, #tpu.memory_space<vmem>>, vector<8x8xf32>
    tpu.vector_store %arg16[%c0_37, %c16], %100 {strides = array<i32>} : memref<8x32xf32, #tpu.memory_space<vmem>>, vector<8x8xf32>,
    %102 = vector.extract_strided_slice %28 {offsets = [0, 24], sizes = [8, 8], strides = [1, 1]} : vector<8x32xf32> to vector<8x8xf32>
    %103 = arith.truncf %102 : vector<8x8xf32> to vector<8x8xbf16>
    %104 = vector.extract_strided_slice %30 {offsets = [0, 24], sizes = [8, 8], strides = [1, 1]} : vector<8x32xf32> to vector<8x8xf32>
    %105 = arith.truncf %104 : vector<8x8xf32> to vector<8x8xbf16>
    %106 = vector.extract_strided_slice %32 {offsets = [0, 24], sizes = [8, 8], strides = [1, 1]} : vector<8x32xf32> to vector<8x8xf32>
    %107 = arith.truncf %106 : vector<8x8xf32> to vector<8x8xbf16>
    "tpu.trace_start"() <{level = 10 : i32, message = "td,sd->ts"}> : () -> ()
    %cst_38 = arith.constant dense<0.000000e+00> : vector<8x8xf32>
    %108 = tpu.matmul %103, %105, %cst_38 {dimension_numbers = #tpu.dot_dimension_numbers<[1], [1], [0], [0], [0, 0, 1, 0], [], []>} : vector<8x8xbf16>, vector<8x8xbf16>, vector<8x8xf32> -> vector<8x8xf32>
    %cst_39 = arith.constant -1.000000e+30 : f32
    "tpu.trace_stop"() : () -> ()
    %109 = vector.broadcast %cst_39 : f32 to vector<8x8xf32>
    %110 = arith.select %35, %108, %109 : vector<8x8xi1>, vector<8x8xf32>
    %cst_40 = arith.constant dense<0xFF800000> : vector<8xf32>
    %111 = vector.multi_reduction <maximumf>, %110, %cst_40 [1] : vector<8x8xf32> to vector<8xf32>
    %112 = vector.shape_cast %111 : vector<8xf32> to vector<8x1xf32>
    %113 = vector.broadcast %112 : vector<8x1xf32> to vector<8x8xf32>
    %114 = arith.subf %110, %113 : vector<8x8xf32>
    %115 = math.exp %114 : vector<8x8xf32>
    %cst_41 = arith.constant dense<0.000000e+00> : vector<8xf32>
    %116 = vector.multi_reduction <add>, %115, %cst_41 [1] : vector<8x8xf32> to vector<8xf32>
    %117 = vector.shape_cast %116 : vector<8xf32> to vector<8x1xf32>
    %118 = tpu.reciprocal %117 {approx = true} : vector<8x1xf32> -> vector<8x1xf32>
    %119 = vector.broadcast %118 : vector<8x1xf32> to vector<8x8xf32>
    %120 = arith.mulf %115, %119 : vector<8x8xf32>
    %121 = arith.truncf %120 : vector<8x8xf32> to vector<8x8xbf16>
    %cst_42 = arith.constant dense<0.000000e+00> : vector<8x8xf32>
    %122 = tpu.matmul %121, %107, %cst_42 {dimension_numbers = #tpu.dot_dimension_numbers<[1], [0], [0], [1], [0, 0, 1, 1], [], []>} : vector<8x8xbf16>, vector<8x8xbf16>, vector<8x8xf32> -> vector<8x8xf32>
    %c0_43 = arith.constant 0 : index
    %c24 = arith.constant 24 : index
    %123 = vector.load %arg16[%c0_43, %c24] : memref<8x32xf32, #tpu.memory_space<vmem>>, vector<8x8xf32>
    tpu.vector_store %arg16[%c0_43, %c24], %122 {strides = array<i32>} : memref<8x32xf32, #tpu.memory_space<vmem>>, vector<8x8xf32>,
    %c0_44 = arith.constant 0 : index
    %c0_45 = arith.constant 0 : index
    %124 = vector.load %arg16[%c0_44, %c0_45] : memref<8x32xf32, #tpu.memory_space<vmem>>, vector<8x32xf32>
    %125 = arith.truncf %124 : vector<8x32xf32> to vector<8x32xbf16>
    %c0_46 = arith.constant 0 : index
    %c0_47 = arith.constant 0 : index
    %126 = vector.load %arg7[%c0_46, %c0_47] : memref<32x32xbf16, #tpu.memory_space<vmem>>, vector<32x32xbf16>
    %cst_48 = arith.constant dense<0.000000e+00> : vector<8x32xf32>
    %127 = tpu.matmul %125, %126, %cst_48 {dimension_numbers = #tpu.dot_dimension_numbers<[1], [0], [0], [1], [0, 0, 1, 1], [], []>} : vector<8x32xbf16>, vector<32x32xbf16>, vector<8x32xf32> -> vector<8x32xf32>
    %c0_49 = arith.constant 0 : index
    %c0_50 = arith.constant 0 : index
    %128 = vector.load %arg8[%c0_49, %c0_50] : memref<1x32xf32, #tpu.memory_space<vmem>>, vector<1x32xf32>
    %129 = vector.broadcast %128 : vector<1x32xf32> to vector<8x32xf32>
    %130 = arith.addf %127, %129 : vector<8x32xf32>
    %131 = arith.addf %1, %130 : vector<8x32xf32>
    %c0_51 = arith.constant 0 : index
    %c0_52 = arith.constant 0 : index
    %132 = vector.load %arg9[%c0_51, %c0_52] : memref<1x32xf32, #tpu.memory_space<vmem>>, vector<1x32xf32>
    %c0_53 = arith.constant 0 : index
    %c0_54 = arith.constant 0 : index
    %133 = vector.load %arg10[%c0_53, %c0_54] : memref<1x32xf32, #tpu.memory_space<vmem>>, vector<1x32xf32>
    %cst_55 = arith.constant dense<0.000000e+00> : vector<8xf32>
    %134 = vector.multi_reduction <add>, %131, %cst_55 [1] : vector<8x32xf32> to vector<8xf32>
    %135 = vector.shape_cast %134 : vector<8xf32> to vector<8x1xf32>
    %cst_56 = arith.constant 3.200000e+01 : f32
    %136 = vector.broadcast %cst_56 : f32 to vector<8x1xf32>
    %137 = arith.divf %135, %136 : vector<8x1xf32>
    %138 = vector.broadcast %137 : vector<8x1xf32> to vector<8x32xf32>
    %139 = arith.subf %131, %138 : vector<8x32xf32>
    %140 = arith.mulf %139, %139 : vector<8x32xf32>
    %cst_57 = arith.constant dense<0.000000e+00> : vector<8xf32>
    %141 = vector.multi_reduction <add>, %140, %cst_57 [1] : vector<8x32xf32> to vector<8xf32>
    %142 = vector.shape_cast %141 : vector<8xf32> to vector<8x1xf32>
    %cst_58 = arith.constant 3.200000e+01 : f32
    %143 = vector.broadcast %cst_58 : f32 to vector<8x1xf32>
    %144 = arith.divf %142, %143 : vector<8x1xf32>
    %145 = vector.broadcast %137 : vector<8x1xf32> to vector<8x32xf32>
    %146 = arith.subf %131, %145 : vector<8x32xf32>
    %cst_59 = arith.constant 9.99999974E-6 : f32
    %147 = vector.broadcast %cst_59 : f32 to vector<8x1xf32>
    %148 = arith.addf %144, %147 : vector<8x1xf32>
    %149 = math.rsqrt %148 : vector<8x1xf32>
    %150 = vector.broadcast %149 : vector<8x1xf32> to vector<8x32xf32>
    %151 = arith.mulf %146, %150 : vector<8x32xf32>
    %152 = vector.broadcast %132 : vector<1x32xf32> to vector<8x32xf32>
    %153 = arith.mulf %151, %152 : vector<8x32xf32>
    %154 = vector.broadcast %133 : vector<1x32xf32> to vector<8x32xf32>
    %155 = arith.addf %153, %154 : vector<8x32xf32>
    %156 = arith.truncf %155 : vector<8x32xf32> to vector<8x32xbf16>
    %cst_60 = arith.constant 0.000000e+00 : f32
    %157 = vector.broadcast %cst_60 : f32 to vector<8x32xf32>
    %c0_i32 = arith.constant 0 : i32
    %c128_i32 = arith.constant 128 : i32
    %158 = arith.muli %c0_i32, %c128_i32 : i32
    %159 = tpu.assume_multiple %158, 128 : i32
    %c0_61 = arith.constant 0 : index
    %160 = arith.index_cast %159 : i32 to index
    %161 = vector.load %arg11[%c0_61, %160] : memref<32x128xbf16, #tpu.memory_space<vmem>>, vector<32x128xbf16>
    %c0_62 = arith.constant 0 : index
    %162 = arith.index_cast %159 : i32 to index
    %163 = vector.load %arg12[%c0_62, %162] : memref<1x128xf32, #tpu.memory_space<vmem>>, vector<1x128xf32>
    %cst_63 = arith.constant dense<0.000000e+00> : vector<8x128xf32>
    %164 = tpu.matmul %156, %161, %cst_63 {dimension_numbers = #tpu.dot_dimension_numbers<[1], [0], [0], [1], [0, 0, 1, 1], [], []>} : vector<8x32xbf16>, vector<32x128xbf16>, vector<8x128xf32> -> vector<8x128xf32>
    %165 = vector.broadcast %163 : vector<1x128xf32> to vector<8x128xf32>
    %166 = arith.addf %164, %165 : vector<8x128xf32>
    %cst_64 = arith.constant 0.000000e+00 : f32
    %167 = vector.broadcast %cst_64 : f32 to vector<8x128xf32>
    %168 = arith.maximumf %166, %167 : vector<8x128xf32>
    %169 = arith.index_cast %159 : i32 to index
    %c0_65 = arith.constant 0 : index
    %170 = vector.load %arg13[%169, %c0_65] : memref<128x32xbf16, #tpu.memory_space<vmem>>, vector<128x32xbf16>
    %171 = arith.truncf %168 : vector<8x128xf32> to vector<8x128xbf16>
    %cst_66 = arith.constant dense<0.000000e+00> : vector<8x32xf32>
    %172 = tpu.matmul %171, %170, %cst_66 {dimension_numbers = #tpu.dot_dimension_numbers<[1], [0], [0], [1], [0, 0, 1, 1], [], []>} : vector<8x128xbf16>, vector<128x32xbf16>, vector<8x32xf32> -> vector<8x32xf32>
    %173 = arith.addf %157, %172 : vector<8x32xf32>
    %c1_i32 = arith.constant 1 : i32
    %c0_67 = arith.constant 0 : index
    %c0_68 = arith.constant 0 : index
    %174 = vector.load %arg14[%c0_67, %c0_68] : memref<1x32xf32, #tpu.memory_space<vmem>>, vector<1x32xf32>
    %175 = vector.broadcast %174 : vector<1x32xf32> to vector<8x32xf32>
    %176 = arith.addf %173, %175 : vector<8x32xf32>
    %177 = arith.addf %131, %176 : vector<8x32xf32>
    %c0_69 = arith.constant 0 : index
    %c0_70 = arith.constant 0 : index
    %c0_71 = arith.constant 0 : index
    %178 = vector.load %arg15[%c0_69, %c0_70, %c0_71] : memref<1x8x32xf32, #tpu.memory_space<vmem>>, vector<1x8x32xf32>
    %179 = vector.shape_cast %178 : vector<1x8x32xf32> to vector<8x32xf32>
    %180 = vector.shape_cast %177 : vector<8x32xf32> to vector<1x8x32xf32>
    tpu.vector_store %arg15[%c0_69, %c0_70, %c0_71], %180 {strides = array<i32>} : memref<1x8x32xf32, #tpu.memory_space<vmem>>, vector<1x8x32xf32>,
    return
  }
  func.func @transform_0(%arg0: i32) -> (i32, i32, i32) {
    %c0_i32 = arith.constant 0 : i32
    %c0_i32_0 = arith.constant 0 : i32
    %c0_i32_1 = arith.constant 0 : i32
    return %arg0, %c0_i32, %c0_i32_0 : i32, i32, i32
  }
  func.func @transform_1(%arg0: i32) -> (i32, i32) {
    %c0_i32 = arith.constant 0 : i32
    %c0_i32_0 = arith.constant 0 : i32
    %c0_i32_1 = arith.constant 0 : i32
    return %c0_i32, %c0_i32_0 : i32, i32
  }
  func.func @transform_2(%arg0: i32) -> (i32, i32) {
    %c0_i32 = arith.constant 0 : i32
    %c0_i32_0 = arith.constant 0 : i32
    %c0_i32_1 = arith.constant 0 : i32
    return %c0_i32, %c0_i32_0 : i32, i32
  }
  func.func @transform_3(%arg0: i32) -> (i32, i32) {
    %c0_i32 = arith.constant 0 : i32
    %c0_i32_0 = arith.constant 0 : i32
    %c0_i32_1 = arith.constant 0 : i32
    return %c0_i32, %c0_i32_0 : i32, i32
  }
  func.func @transform_4(%arg0: i32) -> (i32, i32) {
    %c0_i32 = arith.constant 0 : i32
    %c0_i32_0 = arith.constant 0 : i32
    %c0_i32_1 = arith.constant 0 : i32
    return %c0_i32, %c0_i32_0 : i32, i32
  }
  func.func @transform_5(%arg0: i32) -> (i32, i32) {
    %c0_i32 = arith.constant 0 : i32
    %c0_i32_0 = arith.constant 0 : i32
    %c0_i32_1 = arith.constant 0 : i32
    return %c0_i32, %c0_i32_0 : i32, i32
  }
  func.func @transform_6(%arg0: i32) -> (i32, i32) {
    %c0_i32 = arith.constant 0 : i32
    %c0_i32_0 = arith.constant 0 : i32
    %c0_i32_1 = arith.constant 0 : i32
    return %c0_i32, %c0_i32_0 : i32, i32
  }
  func.func @transform_7(%arg0: i32) -> (i32, i32) {
    %c0_i32 = arith.constant 0 : i32
    %c0_i32_0 = arith.constant 0 : i32
    %c0_i32_1 = arith.constant 0 : i32
    return %c0_i32, %c0_i32_0 : i32, i32
  }
  func.func @transform_8(%arg0: i32) -> (i32, i32) {
    %c0_i32 = arith.constant 0 : i32
    %c0_i32_0 = arith.constant 0 : i32
    %c0_i32_1 = arith.constant 0 : i32
    return %c0_i32, %c0_i32_0 : i32, i32
  }
  func.func @transform_9(%arg0: i32) -> (i32, i32) {
    %c0_i32 = arith.constant 0 : i32
    %c0_i32_0 = arith.constant 0 : i32
    %c0_i32_1 = arith.constant 0 : i32
    return %c0_i32, %c0_i32_0 : i32, i32
  }
  func.func @transform_10(%arg0: i32) -> (i32, i32) {
    %c0_i32 = arith.constant 0 : i32
    %c0_i32_0 = arith.constant 0 : i32
    %c0_i32_1 = arith.constant 0 : i32
    return %c0_i32, %c0_i32_0 : i32, i32
  }
  func.func @transform_11(%arg0: i32) -> (i32, i32) {
    %c0_i32 = arith.constant 0 : i32
    %c0_i32_0 = arith.constant 0 : i32
    %c0_i32_1 = arith.constant 0 : i32
    return %c0_i32, %c0_i32_0 : i32, i32
  }
  func.func @transform_12(%arg0: i32) -> (i32, i32) {
    %c0_i32 = arith.constant 0 : i32
    %c0_i32_0 = arith.constant 0 : i32
    %c0_i32_1 = arith.constant 0 : i32
    return %c0_i32, %c0_i32_0 : i32, i32
  }
  func.func @transform_13(%arg0: i32) -> (i32, i32) {
    %c0_i32 = arith.constant 0 : i32
    %c0_i32_0 = arith.constant 0 : i32
    %c0_i32_1 = arith.constant 0 : i32
    return %c0_i32, %c0_i32_0 : i32, i32
  }
  func.func @transform_14(%arg0: i32) -> (i32, i32, i32) {
    %c0_i32 = arith.constant 0 : i32
    %c0_i32_0 = arith.constant 0 : i32
    %c0_i32_1 = arith.constant 0 : i32
    return %arg0, %c0_i32, %c0_i32_0 : i32, i32, i32
  }
}

</mosaic_0001>

<llo_original>
// kernel: tpu_custom_call.1
$region0: #{tpu_custom_call.1}
  #allocation0 [shape = 'u32[]', space=smem, size = 0x4, offset = 0x4, fixed_abs, tag = 'smem constant byte address 0x4 - core index']
  #allocation1 [shape = 'u32[144,128]{1,0:T(1,128)}', space=vmem, size = 0x12000, scoped, tag = 'internal scratch']
  #allocation2 [shape = 'f32[8,32]{1,0:T(8,128)}', space=vmem, size = 0x1000, scoped, tag = 'scratch operand']
  %s0 = inlined_call_operand.vmem [shape: f32[2,8,32], index: 0, kind: input, shape index: {}]
  %s1 = inlined_call_operand.vmem [shape: f32[1,32], index: 1, kind: input, shape index: {}]
  %s2 = inlined_call_operand.vmem [shape: f32[1,32], index: 2, kind: input, shape index: {}]
  %s3 = inlined_call_operand.vmem [shape: bf16[32,32], index: 3, kind: input, shape index: {}]
  %s4 = inlined_call_operand.vmem [shape: bf16[32,32], index: 4, kind: input, shape index: {}]
  %s5 = inlined_call_operand.vmem [shape: bf16[32,32], index: 5, kind: input, shape index: {}]
  %s6 = inlined_call_operand.vmem [shape: bf16[32,32], index: 6, kind: input, shape index: {}]
  %s7 = inlined_call_operand.hbm [shape: f32[1,32], index: 7, kind: input, shape index: {}]
  %s8 = inlined_call_operand.hbm [shape: f32[1,32], index: 8, kind: input, shape index: {}]
  %s9 = inlined_call_operand.hbm [shape: f32[1,32], index: 9, kind: input, shape index: {}]
  %s10 = inlined_call_operand.vmem [shape: bf16[32,128], index: 10, kind: input, shape index: {}]
  %s11 = inlined_call_operand.vmem [shape: f32[1,128], index: 11, kind: input, shape index: {}]
  %s12 = inlined_call_operand.vmem [shape: bf16[128,32], index: 12, kind: input, shape index: {}]
  %s13 = inlined_call_operand.vmem [shape: f32[1,32], index: 13, kind: input, shape index: {}]
  %s14 = inlined_call_operand.hbm [shape: f32[2,8,32], index: 14, kind: output, shape index: {}]
  %s15 = sld [smem:[#allocation0]]
  $region101: #{tpu_custom_call.1} parent=0
    _
  %s17 = ssub.s32 1, %s15
  %s18 = scalar_select 0, %s17, %s15
  $region1: #{tpu_custom_call.1} parent=0
    #allocation3 [shape = 'u8[512]{0}', space=vmem, size = 0x400, scoped, tag = 'input window, operand 7, single buffered']
    #allocation4 [shape = 's32[2]{0}', space=sflag, size = 0x8, scoped, tag = 'scoped memory for tpu_custom_call.1']
    #allocation5 [shape = 's32[2]{0}', space=sflag, size = 0x8, scoped, tag = 'scoped memory for tpu_custom_call.1']
    #allocation6 [shape = 'u8[512]{0}', space=vmem, size = 0x400, scoped, tag = 'input window, operand 8, single buffered']
    #allocation7 [shape = 's32[1]{0}', space=sflag, size = 0x4, scoped, tag = 'scoped memory for tpu_custom_call.1']
    #allocation8 [shape = 'u8[512]{0}', space=vmem, size = 0x400, scoped, tag = 'input window, operand 9, single buffered']
    #allocation9 [shape = 'u8[8192]{0}', space=vmem, size = 0x2000, scoped, tag = 'output window, operand 0']
    %19 = vsyncpa [#allocation4], 0
    %20 = vsyncpa [#allocation7], 0
    %21 = vsyncpa [#allocation5], 0
    %s22 = scalar_lea.sflag [#allocation5], 1
    %23 = vsyncpa %s22, 0
    loop: start=0, step=1, limit=4
    $region2: #{tpu_custom_call.1} parent=1 // loop_pre_header
      _
    $region3: #{tpu_custom_call.1} parent=1 // loop_header
      %s25 = sphi 0, %s29
      %p26 = scmp.ge.s32.totalorder %s25, 4
      %s35 = sphi 0, %s37
      %s38 = sphi 0, %s35
      %s39 = sphi 0, %s38
      %s55 = sphi 0, %s39
      %s59 = sphi 0, %s59
      %s61 = sphi 0, %s59
      %s62 = sphi 0, %s61
      %s76 = sphi 0, %s62
      %s80 = sphi 0, %s80
      %s82 = sphi 0, %s80
      %s83 = sphi 0, %s82
      %s97 = sphi 0, %s83
      %s101 = sphi 0, %s101
      %s103 = sphi 0, %s101
      %s104 = sphi 0, %s103
      %s118 = sphi 0, %s104
      %s122 = sphi 0, %s122
      %s124 = sphi 0, %s122
      %s125 = sphi 0, %s124
      %s139 = sphi 0, %s125
      %s143 = sphi 0, %s143
      %s145 = sphi 0, %s143
      %s146 = sphi 0, %s145
      %s160 = sphi 0, %s146
      %s164 = sphi 0, %s164
      %s166 = sphi 0, %s164
      %s167 = sphi 0, %s166
      %s181 = sphi 0, %s167
      %s185 = sphi 0, %s185
      %s187 = sphi 0, %s185
      %s188 = sphi 0, %s187
      %s202 = sphi 0, %s188
      %s206 = sphi 0, %s206
      %s208 = sphi 0, %s206
      %s209 = sphi 0, %s208
      %s223 = sphi 0, %s209
      %s227 = sphi 0, %s227
      %s229 = sphi 0, %s227
      %s230 = sphi 0, %s229
      %s244 = sphi 0, %s230
      %s248 = sphi 0, %s248
      %s250 = sphi 0, %s248
      %s251 = sphi 0, %s250
      %s265 = sphi 0, %s251
      %s269 = sphi 0, %s269
      %s271 = sphi 0, %s269
      %s272 = sphi 0, %s271
      %s286 = sphi 0, %s272
      %s290 = sphi 0, %s290
      %s292 = sphi 0, %s290
      %s293 = sphi 0, %s292
      %s307 = sphi 0, %s293
      %s311 = sphi 0, %s311
      %s313 = sphi 0, %s311
      %s314 = sphi 0, %s313
      %s328 = sphi 0, %s314
      %s334 = sphi 0, %s336
      %s337 = sphi 0, %s334
      %s338 = sphi 0, %s337
      %s354 = sphi 0, %s338
    $region4: #{tpu_custom_call.1} parent=1 // loop_header_branch
      %28 = sbr.rel (%p26) target = $region8
    $region5: #{tpu_custom_call.1} parent=1 // loop_body
      %s30 = ssub.s32 %s25, 1
      %s31 = ssub.s32 %s25, 2
      %s32 = sadd.s32 %s25, 1
      %s33 = ssub.s32 %s25, %s32
      %p34 = scmp.eq.s32.totalorder %s33, 0
      %s36 = sadd.s32 %s35, 1
      %s37 = scalar_select %p34, %s35, %s36
      %p40 = pneg %p34
      %p41 = scmp.eq.s32.totalorder %s25, 1
      %p42 = por %p40, %p41
      %p43 = scmp.ne.s32.totalorder %s35, %s38
      %p44 = scmp.eq.s32.totalorder %s25, 0
      %p45 = por %p43, %p44
      %p46 = scmp.ne.s32.totalorder %s35, %s38
      %p47 = scmp.eq.s32.totalorder %s30, 1
      %p48 = por %p46, %p47
      %p49 = scmp.ne.s32.totalorder %s38, %s39
      %p50 = scmp.eq.s32.totalorder %s30, 0
      %p51 = por %p49, %p50
      %p52 = scmp.ne.s32.totalorder %s38, %s39
      %p53 = scmp.eq.s32.totalorder %s31, 1
      %p54 = por %p52, %p53
      %p56 = scmp.ne.s32.totalorder %s39, %s55
      %p57 = scmp.eq.s32.totalorder %s31, 0
      %p58 = por %p56, %p57
      %s60 = sadd.s32 %s59, 1
      %p63 = scmp.eq.s32.totalorder %s25, 1
      %p64 = scmp.ne.s32.totalorder %s59, %s61
      %p65 = scmp.eq.s32.totalorder %s25, 0
      %p66 = por %p64, %p65
      %p67 = scmp.ne.s32.totalorder %s59, %s61
      %p68 = scmp.eq.s32.totalorder %s30, 1
      %p69 = por %p67, %p68
      %p70 = scmp.ne.s32.totalorder %s61, %s62
      %p71 = scmp.eq.s32.totalorder %s30, 0
      %p72 = por %p70, %p71
      %p73 = scmp.ne.s32.totalorder %s61, %s62
      %p74 = scmp.eq.s32.totalorder %s31, 1
      %p75 = por %p73, %p74
      %p77 = scmp.ne.s32.totalorder %s62, %s76
      %p78 = scmp.eq.s32.totalorder %s31, 0
      %p79 = por %p77, %p78
      %s81 = sadd.s32 %s80, 1
      %p84 = scmp.eq.s32.totalorder %s25, 1
      %p85 = scmp.ne.s32.totalorder %s80, %s82
      %p86 = scmp.eq.s32.totalorder %s25, 0
      %p87 = por %p85, %p86
      %p88 = scmp.ne.s32.totalorder %s80, %s82
      %p89 = scmp.eq.s32.totalorder %s30, 1
      %p90 = por %p88, %p89
      %p91 = scmp.ne.s32.totalorder %s82, %s83
      %p92 = scmp.eq.s32.totalorder %s30, 0
      %p93 = por %p91, %p92
      %p94 = scmp.ne.s32.totalorder %s82, %s83
      %p95 = scmp.eq.s32.totalorder %s31, 1
      %p96 = por %p94, %p95
      %p98 = scmp.ne.s32.totalorder %s83, %s97
      %p99 = scmp.eq.s32.totalorder %s31, 0
      %p100 = por %p98, %p99
      %s102 = sadd.s32 %s101, 1
      %p105 = scmp.eq.s32.totalorder %s25, 1
      %p106 = scmp.ne.s32.totalorder %s101, %s103
      %p107 = scmp.eq.s32.totalorder %s25, 0
      %p108 = por %p106, %p107
      %p109 = scmp.ne.s32.totalorder %s101, %s103
      %p110 = scmp.eq.s32.totalorder %s30, 1
      %p111 = por %p109, %p110
      %p112 = scmp.ne.s32.totalorder %s103, %s104
      %p113 = scmp.eq.s32.totalorder %s30, 0
      %p114 = por %p112, %p113
      %p115 = scmp.ne.s32.totalorder %s103, %s104
      %p116 = scmp.eq.s32.totalorder %s31, 1
      %p117 = por %p115, %p116
      %p119 = scmp.ne.s32.totalorder %s104, %s118
      %p120 = scmp.eq.s32.totalorder %s31, 0
      %p121 = por %p119, %p120
      %s123 = sadd.s32 %s122, 1
      %p126 = scmp.eq.s32.totalorder %s25, 1
      %p127 = scmp.ne.s32.totalorder %s122, %s124
      %p128 = scmp.eq.s32.totalorder %s25, 0
      %p129 = por %p127, %p128
      %p130 = scmp.ne.s32.totalorder %s122, %s124
      %p131 = scmp.eq.s32.totalorder %s30, 1
      %p132 = por %p130, %p131
      %p133 = scmp.ne.s32.totalorder %s124, %s125
      %p134 = scmp.eq.s32.totalorder %s30, 0
      %p135 = por %p133, %p134
      %p136 = scmp.ne.s32.totalorder %s124, %s125
      %p137 = scmp.eq.s32.totalorder %s31, 1
      %p138 = por %p136, %p137
      %p140 = scmp.ne.s32.totalorder %s125, %s139
      %p141 = scmp.eq.s32.totalorder %s31, 0
      %p142 = por %p140, %p141
      %s144 = sadd.s32 %s143, 1
      %p147 = scmp.eq.s32.totalorder %s25, 1
      %p148 = scmp.ne.s32.totalorder %s143, %s145
      %p149 = scmp.eq.s32.totalorder %s25, 0
      %p150 = por %p148, %p149
      %p151 = scmp.ne.s32.totalorder %s143, %s145
      %p152 = scmp.eq.s32.totalorder %s30, 1
      %p153 = por %p151, %p152
      %p154 = scmp.ne.s32.totalorder %s145, %s146
      %p155 = scmp.eq.s32.totalorder %s30, 0
      %p156 = por %p154, %p155
      %p157 = scmp.ne.s32.totalorder %s145, %s146
      %p158 = scmp.eq.s32.totalorder %s31, 1
      %p159 = por %p157, %p158
      %p161 = scmp.ne.s32.totalorder %s146, %s160
      %p162 = scmp.eq.s32.totalorder %s31, 0
      %p163 = por %p161, %p162
      %s165 = sadd.s32 %s164, 1
      %p168 = scmp.eq.s32.totalorder %s25, 1
      %p169 = scmp.ne.s32.totalorder %s164, %s166
      %p170 = scmp.eq.s32.totalorder %s25, 0
      %p171 = por %p169, %p170
      %p172 = scmp.ne.s32.totalorder %s164, %s166
      %p173 = scmp.eq.s32.totalorder %s30, 1
      %p174 = por %p172, %p173
      %p175 = scmp.ne.s32.totalorder %s166, %s167
      %p176 = scmp.eq.s32.totalorder %s30, 0
      %p177 = por %p175, %p176
      %p178 = scmp.ne.s32.totalorder %s166, %s167
      %p179 = scmp.eq.s32.totalorder %s31, 1
      %p180 = por %p178, %p179
      %p182 = scmp.ne.s32.totalorder %s167, %s181
      %p183 = scmp.eq.s32.totalorder %s31, 0
      %p184 = por %p182, %p183
      %s186 = sadd.s32 %s185, 1
      %p189 = scmp.eq.s32.totalorder %s25, 1
      %p190 = scmp.ne.s32.totalorder %s185, %s187
      %p191 = scmp.eq.s32.totalorder %s25, 0
      %p192 = por %p190, %p191
      %p193 = scmp.ne.s32.totalorder %s185, %s187
      %p194 = scmp.eq.s32.totalorder %s30, 1
      %p195 = por %p193, %p194
      %p196 = scmp.ne.s32.totalorder %s187, %s188
      %p197 = scmp.eq.s32.totalorder %s30, 0
      %p198 = por %p196, %p197
      %p199 = scmp.ne.s32.totalorder %s187, %s188
      %p200 = scmp.eq.s32.totalorder %s31, 1
      %p201 = por %p199, %p200
      %p203 = scmp.ne.s32.totalorder %s188, %s202
      %p204 = scmp.eq.s32.totalorder %s31, 0
      %p205 = por %p203, %p204
      %s207 = sadd.s32 %s206, 1
      %p210 = scmp.eq.s32.totalorder %s25, 1
      %p211 = scmp.ne.s32.totalorder %s206, %s208
      %p212 = scmp.eq.s32.totalorder %s25, 0
      %p213 = por %p211, %p212
      %p214 = scmp.ne.s32.totalorder %s206, %s208
      %p215 = scmp.eq.s32.totalorder %s30, 1
      %p216 = por %p214, %p215
      %p217 = scmp.ne.s32.totalorder %s208, %s209
      %p218 = scmp.eq.s32.totalorder %s30, 0
      %p219 = por %p217, %p218
      %p220 = scmp.ne.s32.totalorder %s208, %s209
      %p221 = scmp.eq.s32.totalorder %s31, 1
      %p222 = por %p220, %p221
      %p224 = scmp.ne.s32.totalorder %s209, %s223
      %p225 = scmp.eq.s32.totalorder %s31, 0
      %p226 = por %p224, %p225
      %s228 = sadd.s32 %s227, 1
      %p231 = scmp.eq.s32.totalorder %s25, 1
      %p232 = scmp.ne.s32.totalorder %s227, %s229
      %p233 = scmp.eq.s32.totalorder %s25, 0
      %p234 = por %p232, %p233
      %p235 = scmp.ne.s32.totalorder %s227, %s229
      %p236 = scmp.eq.s32.totalorder %s30, 1
      %p237 = por %p235, %p236
      %p238 = scmp.ne.s32.totalorder %s229, %s230
      %p239 = scmp.eq.s32.totalorder %s30, 0
      %p240 = por %p238, %p239
      %p241 = scmp.ne.s32.totalorder %s229, %s230
      %p242 = scmp.eq.s32.totalorder %s31, 1
      %p243 = por %p241, %p242
      %p245 = scmp.ne.s32.totalorder %s230, %s244
      %p246 = scmp.eq.s32.totalorder %s31, 0
      %p247 = por %p245, %p246
      %s249 = sadd.s32 %s248, 1
      %p252 = scmp.eq.s32.totalorder %s25, 1
      %p253 = scmp.ne.s32.totalorder %s248, %s250
      %p254 = scmp.eq.s32.totalorder %s25, 0
      %p255 = por %p253, %p254
      %p256 = scmp.ne.s32.totalorder %s248, %s250
      %p257 = scmp.eq.s32.totalorder %s30, 1
      %p258 = por %p256, %p257
      %p259 = scmp.ne.s32.totalorder %s250, %s251
      %p260 = scmp.eq.s32.totalorder %s30, 0
      %p261 = por %p259, %p260
      %p262 = scmp.ne.s32.totalorder %s250, %s251
      %p263 = scmp.eq.s32.totalorder %s31, 1
      %p264 = por %p262, %p263
      %p266 = scmp.ne.s32.totalorder %s251, %s265
      %p267 = scmp.eq.s32.totalorder %s31, 0
      %p268 = por %p266, %p267
      %s270 = sadd.s32 %s269, 1
      %p273 = scmp.eq.s32.totalorder %s25, 1
      %p274 = scmp.ne.s32.totalorder %s269, %s271
      %p275 = scmp.eq.s32.totalorder %s25, 0
      %p276 = por %p274, %p275
      %p277 = scmp.ne.s32.totalorder %s269, %s271
      %p278 = scmp.eq.s32.totalorder %s30, 1
      %p279 = por %p277, %p278
      %p280 = scmp.ne.s32.totalorder %s271, %s272
      %p281 = scmp.eq.s32.totalorder %s30, 0
      %p282 = por %p280, %p281
      %p283 = scmp.ne.s32.totalorder %s271, %s272
      %p284 = scmp.eq.s32.totalorder %s31, 1
      %p285 = por %p283, %p284
      %p287 = scmp.ne.s32.totalorder %s272, %s286
      %p288 = scmp.eq.s32.totalorder %s31, 0
      %p289 = por %p287, %p288
      %s291 = sadd.s32 %s290, 1
      %p294 = scmp.eq.s32.totalorder %s25, 1
      %p295 = scmp.ne.s32.totalorder %s290, %s292
      %p296 = scmp.eq.s32.totalorder %s25, 0
      %p297 = por %p295, %p296
      %p298 = scmp.ne.s32.totalorder %s290, %s292
      %p299 = scmp.eq.s32.totalorder %s30, 1
      %p300 = por %p298, %p299
      %p301 = scmp.ne.s32.totalorder %s292, %s293
      %p302 = scmp.eq.s32.totalorder %s30, 0
      %p303 = por %p301, %p302
      %p304 = scmp.ne.s32.totalorder %s292, %s293
      %p305 = scmp.eq.s32.totalorder %s31, 1
      %p306 = por %p304, %p305
      %p308 = scmp.ne.s32.totalorder %s293, %s307
      %p309 = scmp.eq.s32.totalorder %s31, 0
      %p310 = por %p308, %p309
      %s312 = sadd.s32 %s311, 1
      %p315 = scmp.eq.s32.totalorder %s25, 1
      %p316 = scmp.ne.s32.totalorder %s311, %s313
      %p317 = scmp.eq.s32.totalorder %s25, 0
      %p318 = por %p316, %p317
      %p319 = scmp.ne.s32.totalorder %s311, %s313
      %p320 = scmp.eq.s32.totalorder %s30, 1
      %p321 = por %p319, %p320
      %p322 = scmp.ne.s32.totalorder %s313, %s314
      %p323 = scmp.eq.s32.totalorder %s30, 0
      %p324 = por %p322, %p323
      %p325 = scmp.ne.s32.totalorder %s313, %s314
      %p326 = scmp.eq.s32.totalorder %s31, 1
      %p327 = por %p325, %p326
      %p329 = scmp.ne.s32.totalorder %s314, %s328
      %p330 = scmp.eq.s32.totalorder %s31, 0
      %p331 = por %p329, %p330
      %s332 = ssub.s32 %s25, %s32
      %p333 = scmp.eq.s32.totalorder %s332, 0
      %s335 = sadd.s32 %s334, 1
      %s336 = scalar_select %p333, %s334, %s335
      %p339 = pneg %p333
      %p340 = scmp.eq.s32.totalorder %s25, 1
      %p341 = por %p339, %p340
      %p342 = scmp.ne.s32.totalorder %s334, %s337
      %p343 = scmp.eq.s32.totalorder %s25, 0
      %p344 = por %p342, %p343
      %p345 = scmp.ne.s32.totalorder %s334, %s337
      %p346 = scmp.eq.s32.totalorder %s30, 1
      %p347 = por %p345, %p346
      %p348 = scmp.ne.s32.totalorder %s337, %s338
      %p349 = scmp.eq.s32.totalorder %s30, 0
      %p350 = por %p348, %p349
      %p351 = scmp.ne.s32.totalorder %s337, %s338
      %p352 = scmp.eq.s32.totalorder %s31, 1
      %p353 = por %p351, %p352
      %p355 = scmp.ne.s32.totalorder %s338, %s354
      %p356 = scmp.eq.s32.totalorder %s31, 0
      %p357 = por %p355, %p356
      %p358 = scmp.le.s32.totalorder 1, %s25
      %p359 = scmp.lt.s32.totalorder %s25, 3
      %p360 = pnand %p358, %p359
      %p361 = pneg %p360
      // Predicated region
      $region9: #{tpu_custom_call.1} parent=5 // pred_check
        _
      $region10: #{tpu_custom_call.1} parent=5 // pred_check_branch
        %363 = sbr.rel (%p360) target = $region12
      $region11: #{tpu_custom_call.1} parent=5 // pred_region
        %s364 = ssub.s32 %s25, 1
        // Predicated region
        $region13: #{tpu_custom_call.1} parent=11 // pred_check
          %p365 = pneg %p72
        $region14: #{tpu_custom_call.1} parent=11 // pred_check_branch
          %367 = sbr.rel (%p365) target = $region16
        $region15: #{tpu_custom_call.1} parent=11 // pred_region
          _
        $region16: #{tpu_custom_call.1} parent=11 // pred_fallthru
          _
        // Predicated region
        $region17: #{tpu_custom_call.1} parent=11 // pred_check
          %p368 = pneg %p93
        $region18: #{tpu_custom_call.1} parent=11 // pred_check_branch
          %370 = sbr.rel (%p368) target = $region20
        $region19: #{tpu_custom_call.1} parent=11 // pred_region
          _
        $region20: #{tpu_custom_call.1} parent=11 // pred_fallthru
          _
        // Predicated region
        $region21: #{tpu_custom_call.1} parent=11 // pred_check
          %p371 = pneg %p114
        $region22: #{tpu_custom_call.1} parent=11 // pred_check_branch
          %373 = sbr.rel (%p371) target = $region24
        $region23: #{tpu_custom_call.1} parent=11 // pred_region
          _
        $region24: #{tpu_custom_call.1} parent=11 // pred_fallthru
          _
        // Predicated region
        $region25: #{tpu_custom_call.1} parent=11 // pred_check
          %p374 = pneg %p135
        $region26: #{tpu_custom_call.1} parent=11 // pred_check_branch
          %376 = sbr.rel (%p374) target = $region28
        $region27: #{tpu_custom_call.1} parent=11 // pred_region
          _
        $region28: #{tpu_custom_call.1} parent=11 // pred_fallthru
          _
        // Predicated region
        $region29: #{tpu_custom_call.1} parent=11 // pred_check
          %p377 = pneg %p156
        $region30: #{tpu_custom_call.1} parent=11 // pred_check_branch
          %379 = sbr.rel (%p377) target = $region32
        $region31: #{tpu_custom_call.1} parent=11 // pred_region
          _
        $region32: #{tpu_custom_call.1} parent=11 // pred_fallthru
          _
        // Predicated region
        $region33: #{tpu_custom_call.1} parent=11 // pred_check
          %p380 = pneg %p177
        $region34: #{tpu_custom_call.1} parent=11 // pred_check_branch
          %382 = sbr.rel (%p380) target = $region36
        $region35: #{tpu_custom_call.1} parent=11 // pred_region
          _
        $region36: #{tpu_custom_call.1} parent=11 // pred_fallthru
          _
        // Predicated region
        $region37: #{tpu_custom_call.1} parent=11 // pred_check
          %p383 = pneg %p198
        $region38: #{tpu_custom_call.1} parent=11 // pred_check_branch
          %385 = sbr.rel (%p383) target = $region40
        $region39: #{tpu_custom_call.1} parent=11 // pred_region
          %s387 = ssub.s32 16, 16
          %388 = vsyncadd [#allocation4], %s387
          %s390 = sshll.u32 [#allocation3], 4
          %s391 = int_to_ptr.vmem [resolvable:$true] %s390
          %393 = dma.hbm_to_vmem [thread:$0]  %s7, 16, %s391, [#allocation4]
        $region40: #{tpu_custom_call.1} parent=11 // pred_fallthru
          _
        // Predicated region
        $region41: #{tpu_custom_call.1} parent=11 // pred_check
          %p394 = pneg %p219
        $region42: #{tpu_custom_call.1} parent=11 // pred_check_branch
          %396 = sbr.rel (%p394) target = $region44
        $region43: #{tpu_custom_call.1} parent=11 // pred_region
          %s398 = ssub.s32 16, 16
          %399 = vsyncadd [#allocation7], %s398
          %s401 = sshll.u32 [#allocation6], 4
          %s402 = int_to_ptr.vmem [resolvable:$true] %s401
          %404 = dma.hbm_to_vmem [thread:$0]  %s8, 16, %s402, [#allocation7]
        $region44: #{tpu_custom_call.1} parent=11 // pred_fallthru
          _
        // Predicated region
        $region45: #{tpu_custom_call.1} parent=11 // pred_check
          %p405 = pneg %p240
        $region46: #{tpu_custom_call.1} parent=11 // pred_check_branch
          %407 = sbr.rel (%p405) target = $region48
        $region47: #{tpu_custom_call.1} parent=11 // pred_region
          %s409 = ssub.s32 16, 16
          %410 = vsyncadd [#allocation7], %s409
          %s412 = sshll.u32 [#allocation8], 4
          %s413 = int_to_ptr.vmem [resolvable:$true] %s412
          %415 = dma.hbm_to_vmem [thread:$0]  %s9, 16, %s413, [#allocation7]
        $region48: #{tpu_custom_call.1} parent=11 // pred_fallthru
          _
        // Predicated region
        $region49: #{tpu_custom_call.1} parent=11 // pred_check
          %p416 = pneg %p261
        $region50: #{tpu_custom_call.1} parent=11 // pred_check_branch
          %418 = sbr.rel (%p416) target = $region52
        $region51: #{tpu_custom_call.1} parent=11 // pred_region
          _
        $region52: #{tpu_custom_call.1} parent=11 // pred_fallthru
          _
        // Predicated region
        $region53: #{tpu_custom_call.1} parent=11 // pred_check
          %p419 = pneg %p282
        $region54: #{tpu_custom_call.1} parent=11 // pred_check_branch
          %421 = sbr.rel (%p419) target = $region56
        $region55: #{tpu_custom_call.1} parent=11 // pred_region
          _
        $region56: #{tpu_custom_call.1} parent=11 // pred_fallthru
          _
        // Predicated region
        $region57: #{tpu_custom_call.1} parent=11 // pred_check
          %p422 = pneg %p303
        $region58: #{tpu_custom_call.1} parent=11 // pred_check_branch
          %424 = sbr.rel (%p422) target = $region60
        $region59: #{tpu_custom_call.1} parent=11 // pred_region
          _
        $region60: #{tpu_custom_call.1} parent=11 // pred_fallthru
          _
        // Predicated region
        $region61: #{tpu_custom_call.1} parent=11 // pred_check
          %p425 = pneg %p324
        $region62: #{tpu_custom_call.1} parent=11 // pred_check_branch
          %427 = sbr.rel (%p425) target = $region64
        $region63: #{tpu_custom_call.1} parent=11 // pred_region
          _
        $region64: #{tpu_custom_call.1} parent=11 // pred_fallthru
          _
      $region12: #{tpu_custom_call.1} parent=5 // pred_fallthru
        _
      %p428 = scmp.lt.s32.totalorder %s25, 2
      // Predicated region
      $region65: #{tpu_custom_call.1} parent=5 // pred_check
        %p429 = pneg %p428
      $region66: #{tpu_custom_call.1} parent=5 // pred_check_branch
        %431 = sbr.rel (%p429) target = $region68
      $region67: #{tpu_custom_call.1} parent=5 // pred_region
        // Predicated region
        $region69: #{tpu_custom_call.1} parent=67 // pred_check
          %p432 = pneg %p45
        $region70: #{tpu_custom_call.1} parent=67 // pred_check_branch
          %434 = sbr.rel (%p432) target = $region72
        $region71: #{tpu_custom_call.1} parent=67 // pred_region
          %p435 = scmp.lt.s32.totalorder %s25, 1
          %s436 = scalar_select %p435, %s25, 1
          %s437 = smul.addr %s436, 8
          %s438 = scalar_lea.vmem %s0, %s437
        $region72: #{tpu_custom_call.1} parent=67 // pred_fallthru
          _
      $region68: #{tpu_custom_call.1} parent=5 // pred_fallthru
        _
      %p439 = scmp.le.s32.totalorder 1, %s25
      %p440 = scmp.lt.s32.totalorder %s25, 3
      %p441 = pnand %p439, %p440
      %p442 = pneg %p441
      // Predicated region
      $region73: #{tpu_custom_call.1} parent=5 // pred_check
        _
      $region74: #{tpu_custom_call.1} parent=5 // pred_check_branch
        %444 = sbr.rel (%p441) target = $region76
      $region75: #{tpu_custom_call.1} parent=5 // pred_region
        %s445 = ssub.s32 %s25, 1
        // Predicated region
        $region77: #{tpu_custom_call.1} parent=75 // pred_check
          %p446 = pneg %p198
        $region78: #{tpu_custom_call.1} parent=75 // pred_check_branch
          %448 = sbr.rel (%p446) target = $region80
        $region79: #{tpu_custom_call.1} parent=75 // pred_region
          %449 = dma.done [#allocation4], 16
        $region80: #{tpu_custom_call.1} parent=75 // pred_fallthru
          _
        // Predicated region
        $region81: #{tpu_custom_call.1} parent=75 // pred_check
          %p450 = pneg %p219
        $region82: #{tpu_custom_call.1} parent=75 // pred_check_branch
          %452 = sbr.rel (%p450) target = $region84
        $region83: #{tpu_custom_call.1} parent=75 // pred_region
          %453 = dma.done [#allocation7], 16
        $region84: #{tpu_custom_call.1} parent=75 // pred_fallthru
          _
        // Predicated region
        $region85: #{tpu_custom_call.1} parent=75 // pred_check
          %p454 = pneg %p240
        $region86: #{tpu_custom_call.1} parent=75 // pred_check_branch
          %456 = sbr.rel (%p454) target = $region88
        $region87: #{tpu_custom_call.1} parent=75 // pred_region
          %457 = dma.done [#allocation7], 16
        $region88: #{tpu_custom_call.1} parent=75 // pred_fallthru
          _
        %p458 = scmp.lt.s32.totalorder %s30, 1
        %s459 = scalar_select %p458, %s30, 1
        %s460 = smul.addr %s459, 8
        %s461 = scalar_lea.vmem %s0, %s460
        %p462 = pneg %p51
        %p463 = pneg %p48
        %p464 = pneg %p72
        %p465 = pneg %p69
        %p466 = pneg %p93
        %p467 = pneg %p90
        %p468 = pneg %p114
        %p469 = pneg %p111
        %p470 = pneg %p135
        %p471 = pneg %p132
        %p472 = pneg %p156
        %p473 = pneg %p153
        %p474 = pneg %p177
        %p475 = pneg %p174
        %p476 = pneg %p198
        %p477 = pneg %p195
        %p478 = pneg %p219
        %p479 = pneg %p216
        %p480 = pneg %p240
        %p481 = pneg %p237
        %p482 = pneg %p261
        %p483 = pneg %p258
        %p484 = pneg %p282
        %p485 = pneg %p279
        %p486 = pneg %p303
        %p487 = pneg %p300
        %p488 = pneg %p324
        %p489 = pneg %p321
        %p490 = pneg %p350
        %p491 = pneg %p347
        %s492 = sand.u32 %s337, 1
        %s493 = scalar_lea.sflag [#allocation5], %s492
        %s494 = sand.u32 %s337, 1
        %s495 = smul.addr %s494, 8
        %s496 = scalar_lea.vmem [#allocation9], %s495
        %p497 = scmp.lt.s32.totalorder %s30, 1
        %s498 = scalar_select %p497, %s30, 1
        %s499 = smul.addr %s498, 8
        %s500 = scalar_lea.vmem %s0, %s499
        %v502 = vld [vmem:[%s500] sm:$0xff]
        %v503 = vld [vmem:[%s1] sm:$0x1]
        %v504 = vld [vmem:[%s2] sm:$0x1]
        %vm505 = vcmask 261120
        %v506 = vsel %vm505, %v502, 0.0
        %507 = vadd.xlane.f32.xlu0 %v506
        %v508 = vpop.xlane.xlu0 %507
        %v509 = vrcp.pop 32.0
        %v510 = vmul.f32 %v508, %v509
        %v511 = vsub.f32 %v502, %v510
        %v512 = vmul.f32 %v511, %v511
        %v513 = vsel %vm505, %v512, 0.0
        %514 = vadd.xlane.f32.xlu0 %v513
        %v515 = vpop.xlane.xlu0 %514
        %v516 = vmul.f32 %v515, %v509
        %v517 = vadd.f32 %v516, 1e-05
        %v518 = vrsqrt.pop %v517
        %v519 = vmul.f32 %v511, %v518
        %v521 = vlaneseq
        %v522 = vshrl.u32 %v521, 7
        %v523 = vsub.s32 0, %v522
        %v524 = vrot.slane %v503, %v523
        %v526 = vmul.f32 %v519, %v524
        %v528 = vlaneseq
        %v529 = vshrl.u32 %v528, 7
        %v530 = vsub.s32 0, %v529
        %v531 = vrot.slane %v504, %v530
        %v533 = vadd.f32 %v526, %v531
        %v534 = vpack.c.bf16 %v533, %v533
        %v535 = vld [vmem:[%s3] sm:$0xf]
        %v536 = vld [vmem:[%s3 + $0x4] sm:$0xf]
        %v537 = vld [vmem:[%s3 + $0x8] sm:$0xf]
        %v538 = vld [vmem:[%s3 + $0xc] sm:$0xf]
        %v543 = vunpack.c.l.b16 %v535
        %v544 = vunpack.c.l.b16 %v536
        %v545 = vunpack.c.l.b16 %v537
        %v546 = vunpack.c.l.b16 %v538
        %v547 = vpack.c.b16 %v544, %v543
        %v548 = vpack.c.b16 %v546, %v545
        %v552 = vsel %vm505, %v534, 0
        %554 = vmatprep.subr.bf16.mxu0 0
        %555 = vmatpush1.bf16.msra.mxu0 %v547
        %556 = vmatprep.subr.bf16.mxu0 0
        %557 = vmatpush1.bf16.msra.mxu0 %v548
        %558 = vmatprep.subr.bf16.mxu0 0
        %559 = vmatpush1.bf16.msra.mxu0 0
        %560 = vmatprep.subr.bf16.mxu0 0
        %561 = vmatpush1.bf16.msra.mxu0 0
        %562 = vmatprep.subr.bf16.mxu0 0
        %563 = vmatpush1.bf16.msra.mxu0 0
        %564 = vmatprep.subr.bf16.mxu0 0
        %565 = vmatpush1.bf16.msra.mxu0 0
        %566 = vmatprep.subr.bf16.mxu0 0
        %567 = vmatpush1.bf16.msra.mxu0 0
        %568 = vmatprep.subr.bf16.mxu0 0
        %569 = vmatpush1.bf16.msra.mxu0 0
        %570 = vmatprep.subr.bf16.mxu0 0
        %571 = vmatpush1.bf16.msra.mxu0 0
        %572 = vmatprep.subr.bf16.mxu0 0
        %573 = vmatpush1.bf16.msra.mxu0 0
        %574 = vmatprep.subr.bf16.mxu0 0
        %575 = vmatpush1.bf16.msra.mxu0 0
        %576 = vmatprep.subr.bf16.mxu0 0
        %577 = vmatpush1.bf16.msra.mxu0 0
        %578 = vmatprep.subr.bf16.mxu0 0
        %579 = vmatpush1.bf16.msra.mxu0 0
        %580 = vmatprep.subr.bf16.mxu0 0
        %581 = vmatpush1.bf16.msra.mxu0 0
        %582 = vmatprep.subr.bf16.mxu0 0
        %583 = vmatpush1.bf16.msra.mxu0 0
        %584 = vmatprep.subr.bf16.mxu0 0
        %585 = vmatpush1.bf16.msra.mxu0 0
        %586 = vmatprep.mubr.bf16.mxu0 0
        %587 = vmatmul.mubr.bf16.gmra.mrb[0].mxu0 %v552
        %v588 = vpop.f32.mrb[0].mxu0
        %v589 = vadd.f32 0.0, %v588
        %v590 = vpop.f32.mrb[0].mxu0
        %v591 = vpop.f32.mrb[0].mxu0
        %v592 = vpop.f32.mrb[0].mxu0
        %593 = vdwg.mxu0
        %v594 = vld [vmem:[%s4] sm:$0xf]
        %v595 = vld [vmem:[%s4 + $0x4] sm:$0xf]
        %v596 = vld [vmem:[%s4 + $0x8] sm:$0xf]
        %v597 = vld [vmem:[%s4 + $0xc] sm:$0xf]
        %v602 = vunpack.c.l.b16 %v594
        %v603 = vunpack.c.l.b16 %v595
        %v604 = vunpack.c.l.b16 %v596
        %v605 = vunpack.c.l.b16 %v597
        %v606 = vpack.c.b16 %v603, %v602
        %v607 = vpack.c.b16 %v605, %v604
        %610 = vmatprep.subr.bf16.mxu0 0
        %611 = vmatpush1.bf16.msra.mxu0 %v606
        %612 = vmatprep.subr.bf16.mxu0 0
        %613 = vmatpush1.bf16.msra.mxu0 %v607
        %614 = vmatprep.subr.bf16.mxu0 0
        %615 = vmatpush1.bf16.msra.mxu0 0
        %616 = vmatprep.subr.bf16.mxu0 0
        %617 = vmatpush1.bf16.msra.mxu0 0
        %618 = vmatprep.subr.bf16.mxu0 0
        %619 = vmatpush1.bf16.msra.mxu0 0
        %620 = vmatprep.subr.bf16.mxu0 0
        %621 = vmatpush1.bf16.msra.mxu0 0
        %622 = vmatprep.subr.bf16.mxu0 0
        %623 = vmatpush1.bf16.msra.mxu0 0
        %624 = vmatprep.subr.bf16.mxu0 0
        %625 = vmatpush1.bf16.msra.mxu0 0
        %626 = vmatprep.subr.bf16.mxu0 0
        %627 = vmatpush1.bf16.msra.mxu0 0
        %628 = vmatprep.subr.bf16.mxu0 0
        %629 = vmatpush1.bf16.msra.mxu0 0
        %630 = vmatprep.subr.bf16.mxu0 0
        %631 = vmatpush1.bf16.msra.mxu0 0
        %632 = vmatprep.subr.bf16.mxu0 0
        %633 = vmatpush1.bf16.msra.mxu0 0
        %634 = vmatprep.subr.bf16.mxu0 0
        %635 = vmatpush1.bf16.msra.mxu0 0
        %636 = vmatprep.subr.bf16.mxu0 0
        %637 = vmatpush1.bf16.msra.mxu0 0
        %638 = vmatprep.subr.bf16.mxu0 0
        %639 = vmatpush1.bf16.msra.mxu0 0
        %640 = vmatprep.subr.bf16.mxu0 0
        %641 = vmatpush1.bf16.msra.mxu0 0
        %642 = vmatprep.mubr.bf16.mxu0 0
        %643 = vmatmul.mubr.bf16.gmra.mrb[0].mxu0 %v552
        %v644 = vpop.f32.mrb[0].mxu0
        %v645 = vadd.f32 0.0, %v644
        %v646 = vpop.f32.mrb[0].mxu0
        %v647 = vpop.f32.mrb[0].mxu0
        %v648 = vpop.f32.mrb[0].mxu0
        %649 = vdwg.mxu0
        %v650 = vld [vmem:[%s5] sm:$0xf]
        %v651 = vld [vmem:[%s5 + $0x4] sm:$0xf]
        %v652 = vld [vmem:[%s5 + $0x8] sm:$0xf]
        %v653 = vld [vmem:[%s5 + $0xc] sm:$0xf]
        %v658 = vunpack.c.l.b16 %v650
        %v659 = vunpack.c.l.b16 %v651
        %v660 = vunpack.c.l.b16 %v652
        %v661 = vunpack.c.l.b16 %v653
        %v662 = vpack.c.b16 %v659, %v658
        %v663 = vpack.c.b16 %v661, %v660
        %666 = vmatprep.subr.bf16.mxu0 0
        %667 = vmatpush1.bf16.msra.mxu0 %v662
        %668 = vmatprep.subr.bf16.mxu0 0
        %669 = vmatpush1.bf16.msra.mxu0 %v663
        %670 = vmatprep.subr.bf16.mxu0 0
        %671 = vmatpush1.bf16.msra.mxu0 0
        %672 = vmatprep.subr.bf16.mxu0 0
        %673 = vmatpush1.bf16.msra.mxu0 0
        %674 = vmatprep.subr.bf16.mxu0 0
        %675 = vmatpush1.bf16.msra.mxu0 0
        %676 = vmatprep.subr.bf16.mxu0 0
        %677 = vmatpush1.bf16.msra.mxu0 0
        %678 = vmatprep.subr.bf16.mxu0 0
        %679 = vmatpush1.bf16.msra.mxu0 0
        %680 = vmatprep.subr.bf16.mxu0 0
        %681 = vmatpush1.bf16.msra.mxu0 0
        %682 = vmatprep.subr.bf16.mxu0 0
        %683 = vmatpush1.bf16.msra.mxu0 0
        %684 = vmatprep.subr.bf16.mxu0 0
        %685 = vmatpush1.bf16.msra.mxu0 0
        %686 = vmatprep.subr.bf16.mxu0 0
        %687 = vmatpush1.bf16.msra.mxu0 0
        %688 = vmatprep.subr.bf16.mxu0 0
        %689 = vmatpush1.bf16.msra.mxu0 0
        %690 = vmatprep.subr.bf16.mxu0 0
        %691 = vmatpush1.bf16.msra.mxu0 0
        %692 = vmatprep.subr.bf16.mxu0 0
        %693 = vmatpush1.bf16.msra.mxu0 0
        %694 = vmatprep.subr.bf16.mxu0 0
        %695 = vmatpush1.bf16.msra.mxu0 0
        %696 = vmatprep.subr.bf16.mxu0 0
        %697 = vmatpush1.bf16.msra.mxu0 0
        %698 = vmatprep.mubr.bf16.mxu0 0
        %699 = vmatmul.mubr.bf16.gmra.mrb[0].mxu0 %v552
        %v700 = vpop.f32.mrb[0].mxu0
        %v701 = vadd.f32 0.0, %v700
        %v702 = vpop.f32.mrb[0].mxu0
        %v703 = vpop.f32.mrb[0].mxu0
        %v704 = vpop.f32.mrb[0].mxu0
        %705 = vdwg.mxu0
        %v706 = vlaneseq
        %v707 = vshrl.u32 %v706, 7
        %v708 = vlaneseq
        %v709 = vand.u32 %v708, 127
        %vm710 = vcmp.ge.s32.totalorder %v707, %v709
        %v711 = vpack.c.bf16 %v589, %v589
        %v712 = vpack.c.bf16 %v645, %v645
        %v713 = vpack.c.bf16 %v701, %v701
        %vm714 = vcmask 64512
        %v716 = vsel %vm714, %v711, 0
        %v719 = vsel %vm714, %v712, 0
        %721 = vmatprep.subr.bf16.mxu0 0
        %722 = vmatpush1.bf16.xpose.msra.mxu0 %v719
        %723 = vmatprep.subr.bf16.mxu0 0
        %724 = vmatpush1.bf16.xpose.msra.mxu0 0
        %725 = vmatprep.subr.bf16.mxu0 0
        %726 = vmatpush1.bf16.xpose.msra.mxu0 0
        %727 = vmatprep.subr.bf16.mxu0 0
        %728 = vmatpush1.bf16.xpose.msra.mxu0 0
        %729 = vmatprep.subr.bf16.mxu0 0
        %730 = vmatpush1.bf16.xpose.msra.mxu0 0
        %731 = vmatprep.subr.bf16.mxu0 0
        %732 = vmatpush1.bf16.xpose.msra.mxu0 0
        %733 = vmatprep.subr.bf16.mxu0 0
        %734 = vmatpush1.bf16.xpose.msra.mxu0 0
        %735 = vmatprep.subr.bf16.mxu0 0
        %736 = vmatpush1.bf16.xpose.msra.mxu0 0
        %737 = vmatprep.subr.bf16.mxu0 0
        %738 = vmatpush1.bf16.xpose.msra.mxu0 0
        %739 = vmatprep.subr.bf16.mxu0 0
        %740 = vmatpush1.bf16.xpose.msra.mxu0 0
        %741 = vmatprep.subr.bf16.mxu0 0
        %742 = vmatpush1.bf16.xpose.msra.mxu0 0
        %743 = vmatprep.subr.bf16.mxu0 0
        %744 = vmatpush1.bf16.xpose.msra.mxu0 0
        %745 = vmatprep.subr.bf16.mxu0 0
        %746 = vmatpush1.bf16.xpose.msra.mxu0 0
        %747 = vmatprep.subr.bf16.mxu0 0
        %748 = vmatpush1.bf16.xpose.msra.mxu0 0
        %749 = vmatprep.subr.bf16.mxu0 0
        %750 = vmatpush1.bf16.xpose.msra.mxu0 0
        %751 = vmatprep.subr.bf16.mxu0 0
        %752 = vmatpush1.bf16.xpose.msra.mxu0 0
        %753 = vmatprep.mubr.bf16.mxu0 0
        %754 = vmatmul.mubr.bf16.gmra.mrb[0].mxu0 %v716
        %v755 = vpop.f32.mrb[0].mxu0
        %v756 = vadd.f32 0.0, %v755
        %v757 = vpop.f32.mrb[0].mxu0
        %v758 = vpop.f32.mrb[0].mxu0
        %v759 = vpop.f32.mrb[0].mxu0
        %760 = vdwg.mxu0
        %v761 = vsel %vm710, %v756, -1e+30
        %v762 = vsel %vm714, %v761, -inf
        %763 = vmax.xlane.f32.xlu0 %v762
        %v764 = vpop.xlane.xlu0 %763
        %v765 = vsub.f32 %v761, %v764
        %v766 = vmul.f32 %v765, 1.442695
        %v767 = vpow.pop %v766
        %v768 = vsel %vm714, %v767, 0.0
        %769 = vadd.xlane.f32.xlu0 %v768
        %v770 = vpop.xlane.xlu0 %769
        %v771 = vrcp.pop %v770
        %v772 = vmul.f32 %v767, %v771
        %v773 = vpack.c.bf16 %v772, %v772
        %v775 = vsel %vm714, %v773, 0
        %vm777 = vcmask 1043456
        %v779 = vsel %vm777, %v713, 0
        %781 = vmatprep.subr.bf16.mxu0 0
        %782 = vmatpush1.bf16.msra.mxu0 %v779
        %783 = vmatprep.subr.bf16.mxu0 0
        %784 = vmatpush1.bf16.msra.mxu0 0
        %785 = vmatprep.subr.bf16.mxu0 0
        %786 = vmatpush1.bf16.msra.mxu0 0
        %787 = vmatprep.subr.bf16.mxu0 0
        %788 = vmatpush1.bf16.msra.mxu0 0
        %789 = vmatprep.subr.bf16.mxu0 0
        %790 = vmatpush1.bf16.msra.mxu0 0
        %791 = vmatprep.subr.bf16.mxu0 0
        %792 = vmatpush1.bf16.msra.mxu0 0
        %793 = vmatprep.subr.bf16.mxu0 0
        %794 = vmatpush1.bf16.msra.mxu0 0
        %795 = vmatprep.subr.bf16.mxu0 0
        %796 = vmatpush1.bf16.msra.mxu0 0
        %797 = vmatprep.subr.bf16.mxu0 0
        %798 = vmatpush1.bf16.msra.mxu0 0
        %799 = vmatprep.subr.bf16.mxu0 0
        %800 = vmatpush1.bf16.msra.mxu0 0
        %801 = vmatprep.subr.bf16.mxu0 0
        %802 = vmatpush1.bf16.msra.mxu0 0
        %803 = vmatprep.subr.bf16.mxu0 0
        %804 = vmatpush1.bf16.msra.mxu0 0
        %805 = vmatprep.subr.bf16.mxu0 0
        %806 = vmatpush1.bf16.msra.mxu0 0
        %807 = vmatprep.subr.bf16.mxu0 0
        %808 = vmatpush1.bf16.msra.mxu0 0
        %809 = vmatprep.subr.bf16.mxu0 0
        %810 = vmatpush1.bf16.msra.mxu0 0
        %811 = vmatprep.subr.bf16.mxu0 0
        %812 = vmatpush1.bf16.msra.mxu0 0
        %813 = vmatprep.mubr.bf16.mxu0 0
        %814 = vmatmul.mubr.bf16.gmra.mrb[0].mxu0 %v775
        %v815 = vpop.f32.mrb[0].mxu0
        %v816 = vadd.f32 0.0, %v815
        %v817 = vpop.f32.mrb[0].mxu0
        %v818 = vpop.f32.mrb[0].mxu0
        %v819 = vpop.f32.mrb[0].mxu0
        %820 = vdwg.mxu0
        %821 = vst.msk [vmem:[#allocation2] sm:$0xff] %vm714, %v816
        %823 = vrot.lane.b32.xlu0 %v711, 120
        %v824 = vpop.permute.xlu0 %823
        %826 = vrot.lane.b32.xlu0 %v712, 120
        %v827 = vpop.permute.xlu0 %826
        %v829 = vsel %vm714, %v824, 0
        %v832 = vsel %vm714, %v827, 0
        %834 = vmatprep.subr.bf16.mxu0 0
        %835 = vmatpush1.bf16.xpose.msra.mxu0 %v832
        %836 = vmatprep.subr.bf16.mxu0 0
        %837 = vmatpush1.bf16.xpose.msra.mxu0 0
        %838 = vmatprep.subr.bf16.mxu0 0
        %839 = vmatpush1.bf16.xpose.msra.mxu0 0
        %840 = vmatprep.subr.bf16.mxu0 0
        %841 = vmatpush1.bf16.xpose.msra.mxu0 0
        %842 = vmatprep.subr.bf16.mxu0 0
        %843 = vmatpush1.bf16.xpose.msra.mxu0 0
        %844 = vmatprep.subr.bf16.mxu0 0
        %845 = vmatpush1.bf16.xpose.msra.mxu0 0
        %846 = vmatprep.subr.bf16.mxu0 0
        %847 = vmatpush1.bf16.xpose.msra.mxu0 0
        %848 = vmatprep.subr.bf16.mxu0 0
        %849 = vmatpush1.bf16.xpose.msra.mxu0 0
        %850 = vmatprep.subr.bf16.mxu0 0
        %851 = vmatpush1.bf16.xpose.msra.mxu0 0
        %852 = vmatprep.subr.bf16.mxu0 0
        %853 = vmatpush1.bf16.xpose.msra.mxu0 0
        %854 = vmatprep.subr.bf16.mxu0 0
        %855 = vmatpush1.bf16.xpose.msra.mxu0 0
        %856 = vmatprep.subr.bf16.mxu0 0
        %857 = vmatpush1.bf16.xpose.msra.mxu0 0
        %858 = vmatprep.subr.bf16.mxu0 0
        %859 = vmatpush1.bf16.xpose.msra.mxu0 0
        %860 = vmatprep.subr.bf16.mxu0 0
        %861 = vmatpush1.bf16.xpose.msra.mxu0 0
        %862 = vmatprep.subr.bf16.mxu0 0
        %863 = vmatpush1.bf16.xpose.msra.mxu0 0
        %864 = vmatprep.subr.bf16.mxu0 0
        %865 = vmatpush1.bf16.xpose.msra.mxu0 0
        %866 = vmatprep.mubr.bf16.mxu0 0
        %867 = vmatmul.mubr.bf16.gmra.mrb[0].mxu0 %v829
        %v868 = vpop.f32.mrb[0].mxu0
        %v869 = vadd.f32 0.0, %v868
        %v870 = vpop.f32.mrb[0].mxu0
        %v871 = vpop.f32.mrb[0].mxu0
        %v872 = vpop.f32.mrb[0].mxu0
        %873 = vdwg.mxu0
        %v874 = vsel %vm710, %v869, -1e+30
        %v875 = vsel %vm714, %v874, -inf
        %876 = vmax.xlane.f32.xlu0 %v875
        %v877 = vpop.xlane.xlu0 %876
        %v878 = vsub.f32 %v874, %v877
        %v879 = vmul.f32 %v878, 1.442695
        %v880 = vpow.pop %v879
        %v881 = vsel %vm714, %v880, 0.0
        %882 = vadd.xlane.f32.xlu0 %v881
        %v883 = vpop.xlane.xlu0 %882
        %v884 = vrcp.pop %v883
        %v885 = vmul.f32 %v880, %v884
        %v886 = vpack.c.bf16 %v885, %v885
        %888 = vrot.lane.b32.xlu0 %v713, 120
        %v889 = vpop.permute.xlu0 %888
        %v891 = vsel %vm714, %v886, 0
        %v894 = vsel %vm777, %v889, 0
        %896 = vmatprep.subr.bf16.mxu0 0
        %897 = vmatpush1.bf16.msra.mxu0 %v894
        %898 = vmatprep.subr.bf16.mxu0 0
        %899 = vmatpush1.bf16.msra.mxu0 0
        %900 = vmatprep.subr.bf16.mxu0 0
        %901 = vmatpush1.bf16.msra.mxu0 0
        %902 = vmatprep.subr.bf16.mxu0 0
        %903 = vmatpush1.bf16.msra.mxu0 0
        %904 = vmatprep.subr.bf16.mxu0 0
        %905 = vmatpush1.bf16.msra.mxu0 0
        %906 = vmatprep.subr.bf16.mxu0 0
        %907 = vmatpush1.bf16.msra.mxu0 0
        %908 = vmatprep.subr.bf16.mxu0 0
        %909 = vmatpush1.bf16.msra.mxu0 0
        %910 = vmatprep.subr.bf16.mxu0 0
        %911 = vmatpush1.bf16.msra.mxu0 0
        %912 = vmatprep.subr.bf16.mxu0 0
        %913 = vmatpush1.bf16.msra.mxu0 0
        %914 = vmatprep.subr.bf16.mxu0 0
        %915 = vmatpush1.bf16.msra.mxu0 0
        %916 = vmatprep.subr.bf16.mxu0 0
        %917 = vmatpush1.bf16.msra.mxu0 0
        %918 = vmatprep.subr.bf16.mxu0 0
        %919 = vmatpush1.bf16.msra.mxu0 0
        %920 = vmatprep.subr.bf16.mxu0 0
        %921 = vmatpush1.bf16.msra.mxu0 0
        %922 = vmatprep.subr.bf16.mxu0 0
        %923 = vmatpush1.bf16.msra.mxu0 0
        %924 = vmatprep.subr.bf16.mxu0 0
        %925 = vmatpush1.bf16.msra.mxu0 0
        %926 = vmatprep.subr.bf16.mxu0 0
        %927 = vmatpush1.bf16.msra.mxu0 0
        %928 = vmatprep.mubr.bf16.mxu0 0
        %929 = vmatmul.mubr.bf16.gmra.mrb[0].mxu0 %v891
        %v930 = vpop.f32.mrb[0].mxu0
        %v931 = vadd.f32 0.0, %v930
        %v932 = vpop.f32.mrb[0].mxu0
        %v933 = vpop.f32.mrb[0].mxu0
        %v934 = vpop.f32.mrb[0].mxu0
        %935 = vdwg.mxu0
        %937 = vrot.lane.b32.xlu0 %v931, 8
        %v938 = vpop.permute.xlu0 %937
        %vm940 = vcmask 130112
        %941 = vst.msk [vmem:[#allocation2] sm:$0xff] %vm940, %v938
        %942 = vrot.lane.b32.xlu0 %v711, 112
        %v943 = vpop.permute.xlu0 %942
        %944 = vrot.lane.b32.xlu0 %v712, 112
        %v945 = vpop.permute.xlu0 %944
        %v947 = vsel %vm714, %v943, 0
        %v950 = vsel %vm714, %v945, 0
        %952 = vmatprep.subr.bf16.mxu0 0
        %953 = vmatpush1.bf16.xpose.msra.mxu0 %v950
        %954 = vmatprep.subr.bf16.mxu0 0
        %955 = vmatpush1.bf16.xpose.msra.mxu0 0
        %956 = vmatprep.subr.bf16.mxu0 0
        %957 = vmatpush1.bf16.xpose.msra.mxu0 0
        %958 = vmatprep.subr.bf16.mxu0 0
        %959 = vmatpush1.bf16.xpose.msra.mxu0 0
        %960 = vmatprep.subr.bf16.mxu0 0
        %961 = vmatpush1.bf16.xpose.msra.mxu0 0
        %962 = vmatprep.subr.bf16.mxu0 0
        %963 = vmatpush1.bf16.xpose.msra.mxu0 0
        %964 = vmatprep.subr.bf16.mxu0 0
        %965 = vmatpush1.bf16.xpose.msra.mxu0 0
        %966 = vmatprep.subr.bf16.mxu0 0
        %967 = vmatpush1.bf16.xpose.msra.mxu0 0
        %968 = vmatprep.subr.bf16.mxu0 0
        %969 = vmatpush1.bf16.xpose.msra.mxu0 0
        %970 = vmatprep.subr.bf16.mxu0 0
        %971 = vmatpush1.bf16.xpose.msra.mxu0 0
        %972 = vmatprep.subr.bf16.mxu0 0
        %973 = vmatpush1.bf16.xpose.msra.mxu0 0
        %974 = vmatprep.subr.bf16.mxu0 0
        %975 = vmatpush1.bf16.xpose.msra.mxu0 0
        %976 = vmatprep.subr.bf16.mxu0 0
        %977 = vmatpush1.bf16.xpose.msra.mxu0 0
        %978 = vmatprep.subr.bf16.mxu0 0
        %979 = vmatpush1.bf16.xpose.msra.mxu0 0
        %980 = vmatprep.subr.bf16.mxu0 0
        %981 = vmatpush1.bf16.xpose.msra.mxu0 0
        %982 = vmatprep.subr.bf16.mxu0 0
        %983 = vmatpush1.bf16.xpose.msra.mxu0 0
        %984 = vmatprep.mubr.bf16.mxu0 0
        %985 = vmatmul.mubr.bf16.gmra.mrb[0].mxu0 %v947
        %v986 = vpop.f32.mrb[0].mxu0
        %v987 = vadd.f32 0.0, %v986
        %v988 = vpop.f32.mrb[0].mxu0
        %v989 = vpop.f32.mrb[0].mxu0
        %v990 = vpop.f32.mrb[0].mxu0
        %991 = vdwg.mxu0
        %v992 = vsel %vm710, %v987, -1e+30
        %v993 = vsel %vm714, %v992, -inf
        %994 = vmax.xlane.f32.xlu0 %v993
        %v995 = vpop.xlane.xlu0 %994
        %v996 = vsub.f32 %v992, %v995
        %v997 = vmul.f32 %v996, 1.442695
        %v998 = vpow.pop %v997
        %v999 = vsel %vm714, %v998, 0.0
        %1000 = vadd.xlane.f32.xlu0 %v999
        %v1001 = vpop.xlane.xlu0 %1000
        %v1002 = vrcp.pop %v1001
        %v1003 = vmul.f32 %v998, %v1002
        %v1004 = vpack.c.bf16 %v1003, %v1003
        %1005 = vrot.lane.b32.xlu0 %v713, 112
        %v1006 = vpop.permute.xlu0 %1005
        %v1008 = vsel %vm714, %v1004, 0
        %v1011 = vsel %vm777, %v1006, 0
        %1013 = vmatprep.subr.bf16.mxu0 0
        %1014 = vmatpush1.bf16.msra.mxu0 %v1011
        %1015 = vmatprep.subr.bf16.mxu0 0
        %1016 = vmatpush1.bf16.msra.mxu0 0
        %1017 = vmatprep.subr.bf16.mxu0 0
        %1018 = vmatpush1.bf16.msra.mxu0 0
        %1019 = vmatprep.subr.bf16.mxu0 0
        %1020 = vmatpush1.bf16.msra.mxu0 0
        %1021 = vmatprep.subr.bf16.mxu0 0
        %1022 = vmatpush1.bf16.msra.mxu0 0
        %1023 = vmatprep.subr.bf16.mxu0 0
        %1024 = vmatpush1.bf16.msra.mxu0 0
        %1025 = vmatprep.subr.bf16.mxu0 0
        %1026 = vmatpush1.bf16.msra.mxu0 0
        %1027 = vmatprep.subr.bf16.mxu0 0
        %1028 = vmatpush1.bf16.msra.mxu0 0
        %1029 = vmatprep.subr.bf16.mxu0 0
        %1030 = vmatpush1.bf16.msra.mxu0 0
        %1031 = vmatprep.subr.bf16.mxu0 0
        %1032 = vmatpush1.bf16.msra.mxu0 0
        %1033 = vmatprep.subr.bf16.mxu0 0
        %1034 = vmatpush1.bf16.msra.mxu0 0
        %1035 = vmatprep.subr.bf16.mxu0 0
        %1036 = vmatpush1.bf16.msra.mxu0 0
        %1037 = vmatprep.subr.bf16.mxu0 0
        %1038 = vmatpush1.bf16.msra.mxu0 0
        %1039 = vmatprep.subr.bf16.mxu0 0
        %1040 = vmatpush1.bf16.msra.mxu0 0
        %1041 = vmatprep.subr.bf16.mxu0 0
        %1042 = vmatpush1.bf16.msra.mxu0 0
        %1043 = vmatprep.subr.bf16.mxu0 0
        %1044 = vmatpush1.bf16.msra.mxu0 0
        %1045 = vmatprep.mubr.bf16.mxu0 0
        %1046 = vmatmul.mubr.bf16.gmra.mrb[0].mxu0 %v1008
        %v1047 = vpop.f32.mrb[0].mxu0
        %v1048 = vadd.f32 0.0, %v1047
        %v1049 = vpop.f32.mrb[0].mxu0
        %v1050 = vpop.f32.mrb[0].mxu0
        %v1051 = vpop.f32.mrb[0].mxu0
        %1052 = vdwg.mxu0
        %1054 = vrot.lane.b32.xlu0 %v1048, 16
        %v1055 = vpop.permute.xlu0 %1054
        %vm1057 = vcmask 195712
        %1058 = vst.msk [vmem:[#allocation2] sm:$0xff] %vm1057, %v1055
        %1059 = vrot.lane.b32.xlu0 %v711, 104
        %v1060 = vpop.permute.xlu0 %1059
        %1061 = vrot.lane.b32.xlu0 %v712, 104
        %v1062 = vpop.permute.xlu0 %1061
        %v1064 = vsel %vm714, %v1060, 0
        %v1067 = vsel %vm714, %v1062, 0
        %1069 = vmatprep.subr.bf16.mxu0 0
        %1070 = vmatpush1.bf16.xpose.msra.mxu0 %v1067
        %1071 = vmatprep.subr.bf16.mxu0 0
        %1072 = vmatpush1.bf16.xpose.msra.mxu0 0
        %1073 = vmatprep.subr.bf16.mxu0 0
        %1074 = vmatpush1.bf16.xpose.msra.mxu0 0
        %1075 = vmatprep.subr.bf16.mxu0 0
        %1076 = vmatpush1.bf16.xpose.msra.mxu0 0
        %1077 = vmatprep.subr.bf16.mxu0 0
        %1078 = vmatpush1.bf16.xpose.msra.mxu0 0
        %1079 = vmatprep.subr.bf16.mxu0 0
        %1080 = vmatpush1.bf16.xpose.msra.mxu0 0
        %1081 = vmatprep.subr.bf16.mxu0 0
        %1082 = vmatpush1.bf16.xpose.msra.mxu0 0
        %1083 = vmatprep.subr.bf16.mxu0 0
        %1084 = vmatpush1.bf16.xpose.msra.mxu0 0
        %1085 = vmatprep.subr.bf16.mxu0 0
        %1086 = vmatpush1.bf16.xpose.msra.mxu0 0
        %1087 = vmatprep.subr.bf16.mxu0 0
        %1088 = vmatpush1.bf16.xpose.msra.mxu0 0
        %1089 = vmatprep.subr.bf16.mxu0 0
        %1090 = vmatpush1.bf16.xpose.msra.mxu0 0
        %1091 = vmatprep.subr.bf16.mxu0 0
        %1092 = vmatpush1.bf16.xpose.msra.mxu0 0
        %1093 = vmatprep.subr.bf16.mxu0 0
        %1094 = vmatpush1.bf16.xpose.msra.mxu0 0
        %1095 = vmatprep.subr.bf16.mxu0 0
        %1096 = vmatpush1.bf16.xpose.msra.mxu0 0
        %1097 = vmatprep.subr.bf16.mxu0 0
        %1098 = vmatpush1.bf16.xpose.msra.mxu0 0
        %1099 = vmatprep.subr.bf16.mxu0 0
        %1100 = vmatpush1.bf16.xpose.msra.mxu0 0
        %1101 = vmatprep.mubr.bf16.mxu0 0
        %1102 = vmatmul.mubr.bf16.gmra.mrb[0].mxu0 %v1064
        %v1103 = vpop.f32.mrb[0].mxu0
        %v1104 = vadd.f32 0.0, %v1103
        %v1105 = vpop.f32.mrb[0].mxu0
        %v1106 = vpop.f32.mrb[0].mxu0
        %v1107 = vpop.f32.mrb[0].mxu0
        %1108 = vdwg.mxu0
        %v1109 = vsel %vm710, %v1104, -1e+30
        %v1110 = vsel %vm714, %v1109, -inf
        %1111 = vmax.xlane.f32.xlu0 %v1110
        %v1112 = vpop.xlane.xlu0 %1111
        %v1113 = vsub.f32 %v1109, %v1112
        %v1114 = vmul.f32 %v1113, 1.442695
        %v1115 = vpow.pop %v1114
        %v1116 = vsel %vm714, %v1115, 0.0
        %1117 = vadd.xlane.f32.xlu0 %v1116
        %v1118 = vpop.xlane.xlu0 %1117
        %v1119 = vrcp.pop %v1118
        %v1120 = vmul.f32 %v1115, %v1119
        %v1121 = vpack.c.bf16 %v1120, %v1120
        %1122 = vrot.lane.b32.xlu0 %v713, 104
        %v1123 = vpop.permute.xlu0 %1122
        %v1125 = vsel %vm714, %v1121, 0
        %v1128 = vsel %vm777, %v1123, 0
        %1130 = vmatprep.subr.bf16.mxu0 0
        %1131 = vmatpush1.bf16.msra.mxu0 %v1128
        %1132 = vmatprep.subr.bf16.mxu0 0
        %1133 = vmatpush1.bf16.msra.mxu0 0
        %1134 = vmatprep.subr.bf16.mxu0 0
        %1135 = vmatpush1.bf16.msra.mxu0 0
        %1136 = vmatprep.subr.bf16.mxu0 0
        %1137 = vmatpush1.bf16.msra.mxu0 0
        %1138 = vmatprep.subr.bf16.mxu0 0
        %1139 = vmatpush1.bf16.msra.mxu0 0
        %1140 = vmatprep.subr.bf16.mxu0 0
        %1141 = vmatpush1.bf16.msra.mxu0 0
        %1142 = vmatprep.subr.bf16.mxu0 0
        %1143 = vmatpush1.bf16.msra.mxu0 0
        %1144 = vmatprep.subr.bf16.mxu0 0
        %1145 = vmatpush1.bf16.msra.mxu0 0
        %1146 = vmatprep.subr.bf16.mxu0 0
        %1147 = vmatpush1.bf16.msra.mxu0 0
        %1148 = vmatprep.subr.bf16.mxu0 0
        %1149 = vmatpush1.bf16.msra.mxu0 0
        %1150 = vmatprep.subr.bf16.mxu0 0
        %1151 = vmatpush1.bf16.msra.mxu0 0
        %1152 = vmatprep.subr.bf16.mxu0 0
        %1153 = vmatpush1.bf16.msra.mxu0 0
        %1154 = vmatprep.subr.bf16.mxu0 0
        %1155 = vmatpush1.bf16.msra.mxu0 0
        %1156 = vmatprep.subr.bf16.mxu0 0
        %1157 = vmatpush1.bf16.msra.mxu0 0
        %1158 = vmatprep.subr.bf16.mxu0 0
        %1159 = vmatpush1.bf16.msra.mxu0 0
        %1160 = vmatprep.subr.bf16.mxu0 0
        %1161 = vmatpush1.bf16.msra.mxu0 0
        %1162 = vmatprep.mubr.bf16.mxu0 0
        %1163 = vmatmul.mubr.bf16.gmra.mrb[0].mxu0 %v1125
        %v1164 = vpop.f32.mrb[0].mxu0
        %v1165 = vadd.f32 0.0, %v1164
        %v1166 = vpop.f32.mrb[0].mxu0
        %v1167 = vpop.f32.mrb[0].mxu0
        %v1168 = vpop.f32.mrb[0].mxu0
        %1169 = vdwg.mxu0
        %1171 = vrot.lane.b32.xlu0 %v1165, 24
        %v1172 = vpop.permute.xlu0 %1171
        %vm1174 = vcmask 261312
        %1175 = vst.msk [vmem:[#allocation2] sm:$0xff] %vm1174, %v1172
        %v1176 = vld [vmem:[#allocation2] sm:$0xff]
        %v1177 = vpack.c.bf16 %v1176, %v1176
        %v1178 = vld [vmem:[%s6] sm:$0xf]
        %v1179 = vld [vmem:[%s6 + $0x4] sm:$0xf]
        %v1180 = vld [vmem:[%s6 + $0x8] sm:$0xf]
        %v1181 = vld [vmem:[%s6 + $0xc] sm:$0xf]
        %v1182 = vld [vmem:[#allocation3] sm:$0x1]
        %v1184 = vlaneseq
        %v1185 = vshrl.u32 %v1184, 7
        %v1186 = vsub.s32 0, %v1185
        %v1187 = vrot.slane %v1182, %v1186
        %v1193 = vunpack.c.l.b16 %v1178
        %v1194 = vunpack.c.l.b16 %v1179
        %v1195 = vunpack.c.l.b16 %v1180
        %v1196 = vunpack.c.l.b16 %v1181
        %v1197 = vpack.c.b16 %v1194, %v1193
        %v1198 = vpack.c.b16 %v1196, %v1195
        %v1202 = vsel %vm505, %v1177, 0
        %1204 = vmatprep.subr.bf16.mxu0 0
        %1205 = vmatpush1.bf16.msra.mxu0 %v1197
        %1206 = vmatprep.subr.bf16.mxu0 0
        %1207 = vmatpush1.bf16.msra.mxu0 %v1198
        %1208 = vmatprep.subr.bf16.mxu0 0
        %1209 = vmatpush1.bf16.msra.mxu0 0
        %1210 = vmatprep.subr.bf16.mxu0 0
        %1211 = vmatpush1.bf16.msra.mxu0 0
        %1212 = vmatprep.subr.bf16.mxu0 0
        %1213 = vmatpush1.bf16.msra.mxu0 0
        %1214 = vmatprep.subr.bf16.mxu0 0
        %1215 = vmatpush1.bf16.msra.mxu0 0
        %1216 = vmatprep.subr.bf16.mxu0 0
        %1217 = vmatpush1.bf16.msra.mxu0 0
        %1218 = vmatprep.subr.bf16.mxu0 0
        %1219 = vmatpush1.bf16.msra.mxu0 0
        %1220 = vmatprep.subr.bf16.mxu0 0
        %1221 = vmatpush1.bf16.msra.mxu0 0
        %1222 = vmatprep.subr.bf16.mxu0 0
        %1223 = vmatpush1.bf16.msra.mxu0 0
        %1224 = vmatprep.subr.bf16.mxu0 0
        %1225 = vmatpush1.bf16.msra.mxu0 0
        %1226 = vmatprep.subr.bf16.mxu0 0
        %1227 = vmatpush1.bf16.msra.mxu0 0
        %1228 = vmatprep.subr.bf16.mxu0 0
        %1229 = vmatpush1.bf16.msra.mxu0 0
        %1230 = vmatprep.subr.bf16.mxu0 0
        %1231 = vmatpush1.bf16.msra.mxu0 0
        %1232 = vmatprep.subr.bf16.mxu0 0
        %1233 = vmatpush1.bf16.msra.mxu0 0
        %1234 = vmatprep.subr.bf16.mxu0 0
        %1235 = vmatpush1.bf16.msra.mxu0 0
        %1236 = vmatprep.mubr.bf16.mxu0 0
        %1237 = vmatmul.mubr.bf16.gmra.mrb[0].mxu0 %v1202
        %v1238 = vpop.f32.mrb[0].mxu0
        %v1239 = vadd.f32 %v1187, %v1238
        %v1240 = vpop.f32.mrb[0].mxu0
        %v1241 = vpop.f32.mrb[0].mxu0
        %v1242 = vpop.f32.mrb[0].mxu0
        %1243 = vdwg.mxu0
        %v1244 = vadd.f32 %v502, %v1239
        %v1245 = vld [vmem:[#allocation6] sm:$0x1]
        %v1246 = vld [vmem:[#allocation8] sm:$0x1]
        %v1247 = vsel %vm505, %v1244, 0.0
        %1248 = vadd.xlane.f32.xlu0 %v1247
        %v1249 = vpop.xlane.xlu0 %1248
        %v1250 = vmul.f32 %v1249, %v509
        %v1251 = vsub.f32 %v1244, %v1250
        %v1252 = vmul.f32 %v1251, %v1251
        %v1253 = vsel %vm505, %v1252, 0.0
        %1254 = vadd.xlane.f32.xlu0 %v1253
        %v1255 = vpop.xlane.xlu0 %1254
        %v1256 = vmul.f32 %v1255, %v509
        %v1257 = vadd.f32 %v1256, 1e-05
        %v1258 = vrsqrt.pop %v1257
        %v1259 = vmul.f32 %v1251, %v1258
        %v1261 = vlaneseq
        %v1262 = vshrl.u32 %v1261, 7
        %v1263 = vsub.s32 0, %v1262
        %v1264 = vrot.slane %v1245, %v1263
        %v1266 = vmul.f32 %v1259, %v1264
        %v1268 = vlaneseq
        %v1269 = vshrl.u32 %v1268, 7
        %v1270 = vsub.s32 0, %v1269
        %v1271 = vrot.slane %v1246, %v1270
        %v1273 = vadd.f32 %v1266, %v1271
        %v1274 = vpack.c.bf16 %v1273, %v1273
        %v1275 = vld [vmem:[%s10] sm:$0xf]
        %v1276 = vld [vmem:[%s10 + $0x4] sm:$0xf]
        %v1277 = vld [vmem:[%s10 + $0x8] sm:$0xf]
        %v1278 = vld [vmem:[%s10 + $0xc] sm:$0xf]
        %v1279 = vld [vmem:[%s11] sm:$0x1]
        %v1281 = vlaneseq
        %v1282 = vshrl.u32 %v1281, 7
        %v1283 = vsub.s32 0, %v1282
        %v1284 = vrot.slane %v1279, %v1283
        %v1290 = vunpack.c.l.b16 %v1275
        %v1291 = vunpack.c.l.b16 %v1276
        %v1292 = vunpack.c.l.b16 %v1277
        %v1293 = vunpack.c.l.b16 %v1278
        %v1294 = vpack.c.b16 %v1291, %v1290
        %v1295 = vpack.c.b16 %v1293, %v1292
        %v1299 = vsel %vm505, %v1274, 0
        %1301 = vmatprep.subr.bf16.mxu0 0
        %1302 = vmatpush1.bf16.msra.mxu0 %v1294
        %1303 = vmatprep.subr.bf16.mxu0 0
        %1304 = vmatpush1.bf16.msra.mxu0 %v1295
        %1305 = vmatprep.subr.bf16.mxu0 0
        %1306 = vmatpush1.bf16.msra.mxu0 0
        %1307 = vmatprep.subr.bf16.mxu0 0
        %1308 = vmatpush1.bf16.msra.mxu0 0
        %1309 = vmatprep.subr.bf16.mxu0 0
        %1310 = vmatpush1.bf16.msra.mxu0 0
        %1311 = vmatprep.subr.bf16.mxu0 0
        %1312 = vmatpush1.bf16.msra.mxu0 0
        %1313 = vmatprep.subr.bf16.mxu0 0
        %1314 = vmatpush1.bf16.msra.mxu0 0
        %1315 = vmatprep.subr.bf16.mxu0 0
        %1316 = vmatpush1.bf16.msra.mxu0 0
        %1317 = vmatprep.subr.bf16.mxu0 0
        %1318 = vmatpush1.bf16.msra.mxu0 0
        %1319 = vmatprep.subr.bf16.mxu0 0
        %1320 = vmatpush1.bf16.msra.mxu0 0
        %1321 = vmatprep.subr.bf16.mxu0 0
        %1322 = vmatpush1.bf16.msra.mxu0 0
        %1323 = vmatprep.subr.bf16.mxu0 0
        %1324 = vmatpush1.bf16.msra.mxu0 0
        %1325 = vmatprep.subr.bf16.mxu0 0
        %1326 = vmatpush1.bf16.msra.mxu0 0
        %1327 = vmatprep.subr.bf16.mxu0 0
        %1328 = vmatpush1.bf16.msra.mxu0 0
        %1329 = vmatprep.subr.bf16.mxu0 0
        %1330 = vmatpush1.bf16.msra.mxu0 0
        %1331 = vmatprep.subr.bf16.mxu0 0
        %1332 = vmatpush1.bf16.msra.mxu0 0
        %1333 = vmatprep.mubr.bf16.mxu0 0
        %1334 = vmatmul.mubr.bf16.gmra.mrb[0].mxu0 %v1299
        %v1335 = vpop.f32.mrb[0].mxu0
        %v1336 = vadd.f32 %v1284, %v1335
        %v1337 = vpop.f32.mrb[0].mxu0
        %v1338 = vpop.f32.mrb[0].mxu0
        %v1339 = vpop.f32.mrb[0].mxu0
        %1340 = vdwg.mxu0
        %v1341 = vmax.f32 %v1336, 0.0
        %v1342 = vld [vmem:[%s12] sm:$0xf]
        %v1343 = vld [vmem:[%s12 + $0x4] sm:$0xf]
        %v1344 = vld [vmem:[%s12 + $0x8] sm:$0xf]
        %v1345 = vld [vmem:[%s12 + $0xc] sm:$0xf]
        %v1346 = vld [vmem:[%s12 + $0x10] sm:$0xf]
        %v1347 = vld [vmem:[%s12 + $0x14] sm:$0xf]
        %v1348 = vld [vmem:[%s12 + $0x18] sm:$0xf]
        %v1349 = vld [vmem:[%s12 + $0x1c] sm:$0xf]
        %v1350 = vld [vmem:[%s12 + $0x20] sm:$0xf]
        %v1351 = vld [vmem:[%s12 + $0x24] sm:$0xf]
        %v1352 = vld [vmem:[%s12 + $0x28] sm:$0xf]
        %v1353 = vld [vmem:[%s12 + $0x2c] sm:$0xf]
        %v1354 = vld [vmem:[%s12 + $0x30] sm:$0xf]
        %v1355 = vld [vmem:[%s12 + $0x34] sm:$0xf]
        %v1356 = vld [vmem:[%s12 + $0x38] sm:$0xf]
        %v1357 = vld [vmem:[%s12 + $0x3c] sm:$0xf]
        %v1358 = vpack.c.bf16 %v1341, %v1341
        %v1359 = vld [vmem:[%s13] sm:$0x1]
        %v1361 = vlaneseq
        %v1362 = vshrl.u32 %v1361, 7
        %v1363 = vsub.s32 0, %v1362
        %v1364 = vrot.slane %v1359, %v1363
        %v1382 = vunpack.c.l.b16 %v1342
        %v1383 = vunpack.c.l.b16 %v1343
        %v1384 = vunpack.c.l.b16 %v1344
        %v1385 = vunpack.c.l.b16 %v1345
        %v1386 = vunpack.c.l.b16 %v1346
        %v1387 = vunpack.c.l.b16 %v1347
        %v1388 = vunpack.c.l.b16 %v1348
        %v1389 = vunpack.c.l.b16 %v1349
        %v1390 = vunpack.c.l.b16 %v1350
        %v1391 = vunpack.c.l.b16 %v1351
        %v1392 = vunpack.c.l.b16 %v1352
        %v1393 = vunpack.c.l.b16 %v1353
        %v1394 = vunpack.c.l.b16 %v1354
        %v1395 = vunpack.c.l.b16 %v1355
        %v1396 = vunpack.c.l.b16 %v1356
        %v1397 = vunpack.c.l.b16 %v1357
        %v1398 = vpack.c.b16 %v1383, %v1382
        %v1399 = vpack.c.b16 %v1385, %v1384
        %v1400 = vpack.c.b16 %v1387, %v1386
        %v1401 = vpack.c.b16 %v1389, %v1388
        %v1402 = vpack.c.b16 %v1391, %v1390
        %v1403 = vpack.c.b16 %v1393, %v1392
        %v1404 = vpack.c.b16 %v1395, %v1394
        %v1405 = vpack.c.b16 %v1397, %v1396
        %1414 = vmatprep.subr.bf16.mxu0 0
        %1415 = vmatpush1.bf16.msra.mxu0 %v1398
        %1416 = vmatprep.subr.bf16.mxu0 0
        %1417 = vmatpush1.bf16.msra.mxu0 %v1399
        %1418 = vmatprep.subr.bf16.mxu0 0
        %1419 = vmatpush1.bf16.msra.mxu0 %v1400
        %1420 = vmatprep.subr.bf16.mxu0 0
        %1421 = vmatpush1.bf16.msra.mxu0 %v1401
        %1422 = vmatprep.subr.bf16.mxu0 0
        %1423 = vmatpush1.bf16.msra.mxu0 %v1402
        %1424 = vmatprep.subr.bf16.mxu0 0
        %1425 = vmatpush1.bf16.msra.mxu0 %v1403
        %1426 = vmatprep.subr.bf16.mxu0 0
        %1427 = vmatpush1.bf16.msra.mxu0 %v1404
        %1428 = vmatprep.subr.bf16.mxu0 0
        %1429 = vmatpush1.bf16.msra.mxu0 %v1405
        %1430 = vmatprep.subr.bf16.mxu0 0
        %1431 = vmatpush1.bf16.msra.mxu0 0
        %1432 = vmatprep.subr.bf16.mxu0 0
        %1433 = vmatpush1.bf16.msra.mxu0 0
        %1434 = vmatprep.subr.bf16.mxu0 0
        %1435 = vmatpush1.bf16.msra.mxu0 0
        %1436 = vmatprep.subr.bf16.mxu0 0
        %1437 = vmatpush1.bf16.msra.mxu0 0
        %1438 = vmatprep.subr.bf16.mxu0 0
        %1439 = vmatpush1.bf16.msra.mxu0 0
        %1440 = vmatprep.subr.bf16.mxu0 0
        %1441 = vmatpush1.bf16.msra.mxu0 0
        %1442 = vmatprep.subr.bf16.mxu0 0
        %1443 = vmatpush1.bf16.msra.mxu0 0
        %1444 = vmatprep.subr.bf16.mxu0 0
        %1445 = vmatpush1.bf16.msra.mxu0 0
        %1446 = vmatprep.mubr.bf16.mxu0 0
        %1447 = vmatmul.mubr.bf16.gmra.mrb[0].mxu0 %v1358
        %v1448 = vpop.f32.mrb[0].mxu0
        %v1449 = vadd.f32 %v1364, %v1448
        %v1450 = vpop.f32.mrb[0].mxu0
        %v1451 = vpop.f32.mrb[0].mxu0
        %v1452 = vpop.f32.mrb[0].mxu0
        %1453 = vdwg.mxu0
        %v1454 = vadd.f32 %v1244, %v1449
        %1455 = vst.msk [vmem:[%s496] sm:$0xff] %vm505, %v1454
        %s1456 = sand.u32 %s337, 1
        %s1457 = scalar_lea.sflag [#allocation5], %s1456
        %s1458 = sand.u32 %s337, 1
        %s1459 = smul.addr %s1458, 8
        %s1460 = scalar_lea.vmem [#allocation9], %s1459
        // Predicated region
        $region89: #{tpu_custom_call.1} parent=75 // pred_check
          %p1461 = pneg %p347
        $region90: #{tpu_custom_call.1} parent=75 // pred_check_branch
          %1463 = sbr.rel (%p1461) target = $region92
        $region91: #{tpu_custom_call.1} parent=75 // pred_region
          %s1465 = ssub.s32 128, 128
          %1466 = vsyncadd %s1457, %s1465
          %s1467 = smul.addr %s30, 128
          %s1468 = scalar_lea.hbm %s14, %s1467
          %s1470 = sshll.u32 %s1460, 4
          %s1471 = int_to_ptr.vmem [resolvable:$true] %s1470
          %1473 = dma.vmem_to_hbm [thread:$0]  %s1471, 128, %s1468, %s1457
        $region92: #{tpu_custom_call.1} parent=75 // pred_fallthru
          _
      $region76: #{tpu_custom_call.1} parent=5 // pred_fallthru
        _
      %p1474 = scmp.le.s32.totalorder 2, %s25
      // Predicated region
      $region93: #{tpu_custom_call.1} parent=5 // pred_check
        %p1475 = pneg %p1474
      $region94: #{tpu_custom_call.1} parent=5 // pred_check_branch
        %1477 = sbr.rel (%p1475) target = $region96
      $region95: #{tpu_custom_call.1} parent=5 // pred_region
        %s1478 = ssub.s32 %s25, 2
        // Predicated region
        $region97: #{tpu_custom_call.1} parent=95 // pred_check
          %p1479 = pneg %p353
        $region98: #{tpu_custom_call.1} parent=95 // pred_check_branch
          %1481 = sbr.rel (%p1479) target = $region100
        $region99: #{tpu_custom_call.1} parent=95 // pred_region
          %s1482 = sand.u32 %s338, 1
          %s1483 = scalar_lea.sflag [#allocation5], %s1482
          %s1484 = sand.u32 %s338, 1
          %s1485 = smul.addr %s1484, 8
          %s1486 = scalar_lea.vmem [#allocation9], %s1485
          %1487 = dma.done %s1483, 128
        $region100: #{tpu_custom_call.1} parent=95 // pred_fallthru
          _
      $region96: #{tpu_custom_call.1} parent=5 // pred_fallthru
        _
    $region6: #{tpu_custom_call.1} parent=1 // loop_footer
      %s29 = sadd.s32 1, %s25
    $region7: #{tpu_custom_call.1} parent=1 // loop_footer_branch
      %24 = sbr.rel target = $region3
    $region8: #{tpu_custom_call.1} parent=1 // loop_exit
      _
    %1488 = vsyncpa [#allocation4], 1
    %s1489 = scalar_lea.sflag [#allocation4], 1
    %1490 = vsyncpa %s1489, 1
    %1491 = vsyncpa [#allocation7], 1
    %1492 = vsyncpa [#allocation5], 1
    %s1493 = scalar_lea.sflag [#allocation5], 1
    %1494 = vsyncpa %s1493, 1

</llo_original>
